<compile_context>
chip_gen: v7x
topology: tpu7x:2x2x1
jax: 0.10.0
libtpu: 0.0.40
codegen_flags: <defaults>
</compile_context>

<pallas_src>
import jax
import jax.numpy as jnp
from jax import lax
from jax.experimental import pallas as pl
from jax.experimental.pallas import tpu as pltpu


def _linear_l2norm(x_ref, w_ref, b_ref):
    """Shared body: returns the L2-normalized (N, tm) tile in f32.

    x_ref: (C, tm) channel-major token tile
    w_ref: (N, C)  torch-native nn.Linear weight (VMEM-resident)
    b_ref: (N, 1)  bias (VMEM-resident)
    """
    # MXU-natural (M,K) x (K,N): contract dim 1 of W with dim 0 of X -> (N, tm). No transposes.
    y = lax.dot_general(
        w_ref[...],
        x_ref[...],
        dimension_numbers=(((1,), (0,)), ((), ())),
        preferred_element_type=jnp.float32,
    )
    y = y + b_ref[...]                               # (N, tm) + (N, 1)
    # F.normalize(p=2, dim=-1): v / max(||v||, 1e-12) == v * rsqrt(max(sumsq, 1e-24)).
    # hidden sits on the sublane axis -> cheap per-token (per-lane) reduce.
    sumsq = jnp.sum(y * y, axis=0, keepdims=True)    # (1, tm)
    return y * lax.rsqrt(jnp.maximum(sumsq, 1e-24))


def _kernel_store_nt(x_ref, w_ref, b_ref, o_ref):
    """hidden % 128 != 0 (e.g. 32): store (N, tm) -> tokens stay on the 128-lane axis."""
    o_ref[...] = _linear_l2norm(x_ref, w_ref, b_ref).astype(o_ref.dtype)


def _kernel_store_tn(x_ref, w_ref, b_ref, o_ref):
    """hidden % 128 == 0: transpose the tile in VMEM (XLU) and store (tm, N) directly."""
    o_ref[...] = _linear_l2norm(x_ref, w_ref, b_ref).T.astype(o_ref.dtype)


def _vmem_budget_bytes():
    """Generation-aware VMEM budget; leave ~25% headroom for Mosaic internal scratch."""
    try:
        phys = int(pltpu.get_tpu_info().vmem_capacity_bytes)  # 64 MiB v7x, 128 MiB v5e/v6e
    except Exception:
        phys = 64 << 20
    return (phys * 3) // 4


def _pick_token_tile(S, C, N, budget):
    """Token-tile size (lane axis of both the x read and the store): multiple of 128 and as
    large as the VMEM budget allows, to amortize the ~0.35us per-grid-step overhead."""
    if S <= 1024:
        return S  # whole token axis in a single tile per image

    def fits(t):
        # 2 x-buffers + double-buffered resident weight + 2 out-buffers + bias + slack.
        return 4 * (2 * C * t + 2 * C * N + 2 * N * t + 8 * N) + (6 << 20) <= budget

    cap = 2048 if budget >= (72 << 20) else 1024      # v5e/v6e take bigger tiles than v7x
    cap = min(cap, (S // 128) * 128) or 128
    best_div = 0
    for t in range(128, cap + 1, 128):
        if fits(t) and S % t == 0:
            best_div = t                              # prefer no ragged boundary tile
    if best_div:
        return best_div
    t = cap
    while t > 128 and not fits(t):
        t -= 128
    return t


@jax.jit
def image_model_forward(x, weight, bias):
    """
    x:      (B, 2048, H, W) float32, NCHW (exactly what the PyTorch module receives)
    weight: (hidden, 2048)  float32, torch-native nn.Linear layout
    bias:   (hidden,)       float32
    returns (B, H*W, hidden) float32, L2-normalized along the last dim.
    """
    B, C, H, W = x.shape
    N, K = weight.shape
    assert K == C, "nn.Linear(in_features=2048) expects 2048 input channels"
    S = H * W

    x3 = x.reshape(B, C, S)          # free reshape; NO HBM transpose / pad of the activation
    b2d = bias.reshape(N, 1)

    budget = _vmem_budget_bytes()
    tm = _pick_token_tile(S, C, N, budget)
    grid = (B, pl.cdiv(S, tm))

    vmem_est = 4 * (2 * C * tm + 2 * C * N + 2 * N * tm + 8 * N) + (6 << 20)
    vmem_limit = int(min(max(vmem_est, 32 << 20), budget))

    # TODO(synk): for very large hidden sizes (2*weight ~ VMEM budget) this resident-weight
    # design would need pl.Buffered(1) on the weight spec and/or an N-tiled two-pass normalize;
    # not needed for this module's configurations, so the portable default pipelining is kept.
    lane_dense_tokens = (N % 128) != 0
    if lane_dense_tokens:
        kernel = _kernel_store_nt
        out_shape = jax.ShapeDtypeStruct((B, N, S), x.dtype)
        out_spec = pl.BlockSpec((pl.Squeezed(), N, tm), lambda b, i: (b, 0, i))
    else:
        kernel = _kernel_store_tn
        out_shape = jax.ShapeDtypeStruct((B, S, N), x.dtype)
        out_spec = pl.BlockSpec((pl.Squeezed(), tm, N), lambda b, i: (b, i, 0))

    out = pl.pallas_call(
        kernel,
        out_shape=out_shape,
        grid_spec=pltpu.PrefetchScalarGridSpec(
            num_scalar_prefetch=0,
            grid=grid,
            in_specs=[
                # Channel-major (C, tm) token tile; batch dim squeezed away.
                pl.BlockSpec((pl.Squeezed(), C, tm), lambda b, i: (b, 0, i)),
                # Full torch-layout weight, VMEM-resident (constant block index -> single DMA).
                pl.BlockSpec((N, C), lambda b, i: (0, 0)),
                # Bias, resident.
                pl.BlockSpec((N, 1), lambda b, i: (0, 0)),
            ],
            out_specs=out_spec,
        ),
        compiler_params=pltpu.CompilerParams(
            dimension_semantics=("parallel", "parallel"),
            vmem_limit_bytes=vmem_limit,
        ),
    )(x3, weight, b2d)

    if lane_dense_tokens:
        # Tiny output transpose (hidden << 2048): ~N/2048 of the x read traffic.
        out = jnp.transpose(out, (0, 2, 1))
    return out


def _reference(x, weight, bias):
    B, C, H, W = x.shape
    tokens = jnp.transpose(x.reshape(B, C, H * W), (0, 2, 1))     # (B, S, C)
    y = tokens @ weight.T + bias
    nrm = jnp.sqrt(jnp.sum(y * y, axis=-1, keepdims=True))
    return y / jnp.maximum(nrm, 1e-12)


if __name__ == "__main__":
    key = jax.random.PRNGKey(0)
    kx1, kx2, kw1, kw2, kb1, kb2 = jax.random.split(key, 6)
    bound = 1.0 / jnp.sqrt(2048.0)   # nn.Linear default init bound (fan_in = 2048)

    # --- Config 1 (primary demo): hidden=32 -> lane-dense-over-tokens store path ---
    B, C, H, W, hidden = 2, 2048, 16, 16, 32
    x = jax.random.normal(kx1, (B, C, H, W), jnp.float32)
    w = jax.random.uniform(kw1, (hidden, C), jnp.float32, -bound, bound)   # torch layout
    b = jax.random.uniform(kb1, (hidden,), jnp.float32, -bound, bound)
    out = jax.block_until_ready(image_model_forward(x, w, b))
    ref = _reference(x, w, b)
    assert out.shape == (B, H * W, hidden)
    assert jnp.allclose(out, ref, atol=3e-5, rtol=3e-5), "hidden=32 path mismatch vs reference"

    # --- Config 2: hidden=128 -> direct (tm, N) store path (no wrapper transpose) ---
    hidden2 = 128
    x2 = jax.random.normal(kx2, (1, C, 16, 16), jnp.float32)
    w2 = jax.random.uniform(kw2, (hidden2, C), jnp.float32, -bound, bound)
    b2 = jax.random.uniform(kb2, (hidden2,), jnp.float32, -bound, bound)
    out2 = jax.block_until_ready(image_model_forward(x2, w2, b2))
    ref2 = _reference(x2, w2, b2)
    assert out2.shape == (1, 256, hidden2)
    assert jnp.allclose(out2, ref2, atol=3e-5, rtol=3e-5), "hidden=128 path mismatch vs reference"

    print("KERNEL_OK")
</pallas_src>

<mosaic_0001>
module attributes {stable_mosaic.version = 11 : i64} {
  func.func @_kernel_store_nt(%arg0: i32, %arg1: i32, %arg2: memref<1x2048x256xf32, #tpu.memory_space<vmem>>, %arg3: memref<32x2048xf32, #tpu.memory_space<vmem>>, %arg4: memref<32x1xf32, #tpu.memory_space<vmem>>, %arg5: memref<1x32x256xf32, #tpu.memory_space<vmem>>) attributes {dimension_semantics = [#tpu.dimension_semantics<parallel>, #tpu.dimension_semantics<parallel>], iteration_bounds = array<i64: 2, 1>, scalar_prefetch = 0 : i64, scratch_operands = 0 : i64, tpu.core_type = #tpu.core_type<tc>, window_params = [{transform_indices = @transform_0, window_bounds = array<i64: 1, 2048, 256>}, {pipeline_mode = #tpu.pipeline_mode<synchronous>, transform_indices = @transform_1, window_bounds = array<i64: 32, 2048>}, {pipeline_mode = #tpu.pipeline_mode<synchronous>, transform_indices = @transform_2, window_bounds = array<i64: 32, 1>}, {transform_indices = @transform_3, window_bounds = array<i64: 1, 32, 256>}]} {
    %c0 = arith.constant 0 : index
    %c0_0 = arith.constant 0 : index
    %0 = vector.load %arg3[%c0, %c0_0] : memref<32x2048xf32, #tpu.memory_space<vmem>>, vector<32x2048xf32>
    %c0_1 = arith.constant 0 : index
    %c0_2 = arith.constant 0 : index
    %c0_3 = arith.constant 0 : index
    %1 = vector.load %arg2[%c0_1, %c0_2, %c0_3] : memref<1x2048x256xf32, #tpu.memory_space<vmem>>, vector<1x2048x256xf32>
    %2 = vector.shape_cast %1 : vector<1x2048x256xf32> to vector<2048x256xf32>
    %cst = arith.constant dense<0.000000e+00> : vector<32x256xf32>
    %3 = tpu.matmul %0, %2, %cst {dimension_numbers = #tpu.dot_dimension_numbers<[1], [0], [0], [1], [0, 0, 1, 1], [], []>} : vector<32x2048xf32>, vector<2048x256xf32>, vector<32x256xf32> -> vector<32x256xf32>
    %c0_4 = arith.constant 0 : index
    %c0_5 = arith.constant 0 : index
    %4 = vector.load %arg4[%c0_4, %c0_5] : memref<32x1xf32, #tpu.memory_space<vmem>>, vector<32x1xf32>
    %5 = vector.broadcast %4 : vector<32x1xf32> to vector<32x256xf32>
    %6 = arith.addf %3, %5 : vector<32x256xf32>
    %7 = arith.mulf %6, %6 : vector<32x256xf32>
    %cst_6 = arith.constant dense<0.000000e+00> : vector<256xf32>
    %8 = vector.multi_reduction <add>, %7, %cst_6 [0] : vector<32x256xf32> to vector<256xf32>
    %9 = vector.shape_cast %8 : vector<256xf32> to vector<1x256xf32>
    %cst_7 = arith.constant 1.000000e-24 : f32
    %10 = vector.broadcast %cst_7 : f32 to vector<1x256xf32>
    %11 = arith.maximumf %9, %10 : vector<1x256xf32>
    %12 = math.rsqrt %11 : vector<1x256xf32>
    %13 = vector.broadcast %12 : vector<1x256xf32> to vector<32x256xf32>
    %14 = arith.mulf %6, %13 : vector<32x256xf32>
    %c0_8 = arith.constant 0 : index
    %c0_9 = arith.constant 0 : index
    %c0_10 = arith.constant 0 : index
    %15 = vector.load %arg5[%c0_8, %c0_9, %c0_10] : memref<1x32x256xf32, #tpu.memory_space<vmem>>, vector<1x32x256xf32>
    %16 = vector.shape_cast %15 : vector<1x32x256xf32> to vector<32x256xf32>
    %17 = vector.shape_cast %14 : vector<32x256xf32> to vector<1x32x256xf32>
    tpu.vector_store %arg5[%c0_8, %c0_9, %c0_10], %17 {strides = array<i32>} : memref<1x32x256xf32, #tpu.memory_space<vmem>>, vector<1x32x256xf32>,
    return
  }
  func.func @transform_0(%arg0: i32, %arg1: i32) -> (i32, i32, i32) {
    %c0_i32 = arith.constant 0 : i32
    %c0_i32_0 = arith.constant 0 : i32
    return %arg0, %c0_i32, %arg1 : i32, i32, i32
  }
  func.func @transform_1(%arg0: i32, %arg1: i32) -> (i32, i32) {
    %c0_i32 = arith.constant 0 : i32
    %c0_i32_0 = arith.constant 0 : i32
    %c0_i32_1 = arith.constant 0 : i32
    return %c0_i32, %c0_i32_0 : i32, i32
  }
  func.func @transform_2(%arg0: i32, %arg1: i32) -> (i32, i32) {
    %c0_i32 = arith.constant 0 : i32
    %c0_i32_0 = arith.constant 0 : i32
    %c0_i32_1 = arith.constant 0 : i32
    return %c0_i32, %c0_i32_0 : i32, i32
  }
  func.func @transform_3(%arg0: i32, %arg1: i32) -> (i32, i32, i32) {
    %c0_i32 = arith.constant 0 : i32
    %c0_i32_0 = arith.constant 0 : i32
    return %arg0, %c0_i32, %arg1 : i32, i32, i32
  }
}

</mosaic_0001>

<llo_original>
// kernel: image_model_forward.1
$region0: #{image_model_forward.1}
  #allocation0 [shape = 'u32[]', space=smem, size = 0x4, offset = 0x4, fixed_abs, tag = 'smem constant byte address 0x4 - core index']
  #allocation1 [shape = 'u32[144,128]{1,0:T(1,128)}', space=vmem, size = 0x12000, scoped, tag = 'internal scratch']
  %s0 = inlined_call_operand.vmem [shape: f32[2,2048,256], index: 0, kind: input, shape index: {}]
  %s1 = inlined_call_operand.vmem [shape: f32[32,2048], index: 1, kind: input, shape index: {}]
  %s2 = inlined_call_operand.vmem [shape: f32[32,1], index: 2, kind: input, shape index: {}]
  %s3 = inlined_call_operand.hbm [shape: f32[2,32,256], index: 3, kind: output, shape index: {}]
  %s4 = sld [smem:[#allocation0]]
  $region45: #{image_model_forward.1} parent=0
    _
  %s6 = ssub.s32 1, %s4
  %s7 = scalar_select 0, %s6, %s4
  $region1: #{image_model_forward.1} parent=0
    #allocation2 [shape = 'u8[65536]{0}', space=vmem, size = 0x10000, scoped, tag = 'output window, operand 0']
    #allocation3 [shape = 's32[2]{0}', space=sflag, size = 0x8, scoped, tag = 'scoped memory for image_model_forward.1']
    %8 = vsyncpa [#allocation3], 0
    %s9 = scalar_lea.sflag [#allocation3], 1
    %10 = vsyncpa %s9, 0
    loop: start=0, step=1, limit=4
    $region2: #{image_model_forward.1} parent=1 // loop_pre_header
      _
    $region3: #{image_model_forward.1} parent=1 // loop_header
      %s12 = sphi 0, %s16
      %p13 = scmp.ge.s32.totalorder %s12, 4
      %s19 = sphi 0, %s31
      %s20 = sphi 0, %s27
      %s21 = sphi 0, %s19
      %s22 = sphi 0, %s20
      %s23 = sphi 0, %s21
      %s24 = sphi 0, %s22
      %s36 = sphi 0, %s38
      %s39 = sphi 0, %s36
      %s40 = sphi 0, %s39
      %s56 = sphi 0, %s40
      %s60 = sphi 0, %s60
      %s62 = sphi 0, %s60
      %s63 = sphi 0, %s62
      %s77 = sphi 0, %s63
      %s81 = sphi 0, %s81
      %s83 = sphi 0, %s81
      %s84 = sphi 0, %s83
      %s98 = sphi 0, %s84
      %s106 = sphi 0, %s108
      %s109 = sphi 0, %s106
      %s110 = sphi 0, %s109
      %s126 = sphi 0, %s110
    $region4: #{image_model_forward.1} parent=1 // loop_header_branch
      %15 = sbr.rel (%p13) target = $region8
    $region5: #{image_model_forward.1} parent=1 // loop_body
      %s17 = ssub.s32 %s12, 1
      %s18 = ssub.s32 %s12, 2
      %s25 = sadd.s32 1, %s20
      %p26 = scmp.ge.s32.totalorder %s25, 1
      %s27 = scalar_select %p26, 0, %s25
      %s28 = sadd.s32 1, %s19
      %s29 = scalar_select %p26, %s28, %s19
      %p30 = scmp.ge.s32.totalorder %s29, 2
      %s31 = scalar_select %p30, 0, %s29
      %s32 = ssub.s32 %s19, %s31
      %s33 = ssub.s32 %s20, %s27
      %s34 = sor.u32 %s32, %s33
      %p35 = scmp.eq.s32.totalorder %s34, 0
      %s37 = sadd.s32 %s36, 1
      %s38 = scalar_select %p35, %s36, %s37
      %p41 = pneg %p35
      %p42 = scmp.eq.s32.totalorder %s12, 1
      %p43 = por %p41, %p42
      %p44 = scmp.ne.s32.totalorder %s36, %s39
      %p45 = scmp.eq.s32.totalorder %s12, 0
      %p46 = por %p44, %p45
      %p47 = scmp.ne.s32.totalorder %s36, %s39
      %p48 = scmp.eq.s32.totalorder %s17, 1
      %p49 = por %p47, %p48
      %p50 = scmp.ne.s32.totalorder %s39, %s40
      %p51 = scmp.eq.s32.totalorder %s17, 0
      %p52 = por %p50, %p51
      %p53 = scmp.ne.s32.totalorder %s39, %s40
      %p54 = scmp.eq.s32.totalorder %s18, 1
      %p55 = por %p53, %p54
      %p57 = scmp.ne.s32.totalorder %s40, %s56
      %p58 = scmp.eq.s32.totalorder %s18, 0
      %p59 = por %p57, %p58
      %s61 = sadd.s32 %s60, 1
      %p64 = scmp.eq.s32.totalorder %s12, 1
      %p65 = scmp.ne.s32.totalorder %s60, %s62
      %p66 = scmp.eq.s32.totalorder %s12, 0
      %p67 = por %p65, %p66
      %p68 = scmp.ne.s32.totalorder %s60, %s62
      %p69 = scmp.eq.s32.totalorder %s17, 1
      %p70 = por %p68, %p69
      %p71 = scmp.ne.s32.totalorder %s62, %s63
      %p72 = scmp.eq.s32.totalorder %s17, 0
      %p73 = por %p71, %p72
      %p74 = scmp.ne.s32.totalorder %s62, %s63
      %p75 = scmp.eq.s32.totalorder %s18, 1
      %p76 = por %p74, %p75
      %p78 = scmp.ne.s32.totalorder %s63, %s77
      %p79 = scmp.eq.s32.totalorder %s18, 0
      %p80 = por %p78, %p79
      %s82 = sadd.s32 %s81, 1
      %p85 = scmp.eq.s32.totalorder %s12, 1
      %p86 = scmp.ne.s32.totalorder %s81, %s83
      %p87 = scmp.eq.s32.totalorder %s12, 0
      %p88 = por %p86, %p87
      %p89 = scmp.ne.s32.totalorder %s81, %s83
      %p90 = scmp.eq.s32.totalorder %s17, 1
      %p91 = por %p89, %p90
      %p92 = scmp.ne.s32.totalorder %s83, %s84
      %p93 = scmp.eq.s32.totalorder %s17, 0
      %p94 = por %p92, %p93
      %p95 = scmp.ne.s32.totalorder %s83, %s84
      %p96 = scmp.eq.s32.totalorder %s18, 1
      %p97 = por %p95, %p96
      %p99 = scmp.ne.s32.totalorder %s84, %s98
      %p100 = scmp.eq.s32.totalorder %s18, 0
      %p101 = por %p99, %p100
      %s102 = ssub.s32 %s19, %s31
      %s103 = ssub.s32 %s20, %s27
      %s104 = sor.u32 %s102, %s103
      %p105 = scmp.eq.s32.totalorder %s104, 0
      %s107 = sadd.s32 %s106, 1
      %s108 = scalar_select %p105, %s106, %s107
      %p111 = pneg %p105
      %p112 = scmp.eq.s32.totalorder %s12, 1
      %p113 = por %p111, %p112
      %p114 = scmp.ne.s32.totalorder %s106, %s109
      %p115 = scmp.eq.s32.totalorder %s12, 0
      %p116 = por %p114, %p115
      %p117 = scmp.ne.s32.totalorder %s106, %s109
      %p118 = scmp.eq.s32.totalorder %s17, 1
      %p119 = por %p117, %p118
      %p120 = scmp.ne.s32.totalorder %s109, %s110
      %p121 = scmp.eq.s32.totalorder %s17, 0
      %p122 = por %p120, %p121
      %p123 = scmp.ne.s32.totalorder %s109, %s110
      %p124 = scmp.eq.s32.totalorder %s18, 1
      %p125 = por %p123, %p124
      %p127 = scmp.ne.s32.totalorder %s110, %s126
      %p128 = scmp.eq.s32.totalorder %s18, 0
      %p129 = por %p127, %p128
      %p130 = scmp.le.s32.totalorder 1, %s12
      %p131 = scmp.lt.s32.totalorder %s12, 3
      %p132 = pnand %p130, %p131
      %p133 = pneg %p132
      // Predicated region
      $region9: #{image_model_forward.1} parent=5 // pred_check
        _
      $region10: #{image_model_forward.1} parent=5 // pred_check_branch
        %135 = sbr.rel (%p132) target = $region12
      $region11: #{image_model_forward.1} parent=5 // pred_region
        %s136 = ssub.s32 %s12, 1
        // Predicated region
        $region13: #{image_model_forward.1} parent=11 // pred_check
          %p137 = pneg %p73
        $region14: #{image_model_forward.1} parent=11 // pred_check_branch
          %139 = sbr.rel (%p137) target = $region16
        $region15: #{image_model_forward.1} parent=11 // pred_region
          _
        $region16: #{image_model_forward.1} parent=11 // pred_fallthru
          _
        // Predicated region
        $region17: #{image_model_forward.1} parent=11 // pred_check
          %p140 = pneg %p94
        $region18: #{image_model_forward.1} parent=11 // pred_check_branch
          %142 = sbr.rel (%p140) target = $region20
        $region19: #{image_model_forward.1} parent=11 // pred_region
          _
        $region20: #{image_model_forward.1} parent=11 // pred_fallthru
          _
      $region12: #{image_model_forward.1} parent=5 // pred_fallthru
        _
      %p143 = scmp.lt.s32.totalorder %s12, 2
      // Predicated region
      $region21: #{image_model_forward.1} parent=5 // pred_check
        %p144 = pneg %p143
      $region22: #{image_model_forward.1} parent=5 // pred_check_branch
        %146 = sbr.rel (%p144) target = $region24
      $region23: #{image_model_forward.1} parent=5 // pred_region
        // Predicated region
        $region25: #{image_model_forward.1} parent=23 // pred_check
          %p147 = pneg %p46
        $region26: #{image_model_forward.1} parent=23 // pred_check_branch
          %149 = sbr.rel (%p147) target = $region28
        $region27: #{image_model_forward.1} parent=23 // pred_region
          %s150 = smul.u32 2, %s20
          %p151 = scmp.lt.s32.totalorder %s19, 1
          %s152 = scalar_select %p151, %s19, 1
          %p153 = scmp.lt.s32.totalorder %s150, 1
          %s154 = scalar_select %p153, %s150, 1
          %s155 = smul.addr %s152, 512
          %s156 = sadd.s32 %s154, %s155
          %s157 = smul.addr %s156, 8
          %s158 = scalar_lea.vmem %s0, %s157
          %s159 = smul.u32 2, %s20
        $region28: #{image_model_forward.1} parent=23 // pred_fallthru
          _
      $region24: #{image_model_forward.1} parent=5 // pred_fallthru
        _
      %p160 = scmp.le.s32.totalorder 1, %s12
      %p161 = scmp.lt.s32.totalorder %s12, 3
      %p162 = pnand %p160, %p161
      %p163 = pneg %p162
      // Predicated region
      $region29: #{image_model_forward.1} parent=5 // pred_check
        _
      $region30: #{image_model_forward.1} parent=5 // pred_check_branch
        %165 = sbr.rel (%p162) target = $region32
      $region31: #{image_model_forward.1} parent=5 // pred_region
        %s166 = ssub.s32 %s12, 1
        %s167 = smul.u32 2, %s22
        %p168 = scmp.lt.s32.totalorder %s21, 1
        %s169 = scalar_select %p168, %s21, 1
        %p170 = scmp.lt.s32.totalorder %s167, 1
        %s171 = scalar_select %p170, %s167, 1
        %s172 = smul.addr %s169, 512
        %s173 = sadd.s32 %s171, %s172
        %s174 = smul.addr %s173, 8
        %s175 = scalar_lea.vmem %s0, %s174
        %p176 = pneg %p52
        %p177 = pneg %p49
        %p178 = pneg %p73
        %p179 = pneg %p70
        %p180 = pneg %p94
        %p181 = pneg %p91
        %p182 = pneg %p122
        %p183 = pneg %p119
        %s184 = sand.u32 %s109, 1
        %s185 = scalar_lea.sflag [#allocation3], %s184
        %s186 = sand.u32 %s109, 1
        %s187 = smul.addr %s186, 64
        %s188 = scalar_lea.vmem [#allocation2], %s187
        %s189 = smul.u32 2, %s22
        %p190 = scmp.lt.s32.totalorder %s21, 1
        %s191 = scalar_select %p190, %s21, 1
        %p192 = scmp.lt.s32.totalorder %s189, 1
        %s193 = scalar_select %p192, %s189, 1
        %s194 = smul.addr %s191, 512
        %s195 = sadd.s32 %s193, %s194
        %s196 = smul.addr %s195, 8
        %s197 = scalar_lea.vmem %s0, %s196
        %s198 = smul.u32 2, %s22
        %s199 = smul.u32 2, %s22
        %v200 = vld [vmem:[%s1] sm:$0xff]
        %v201 = vld [vmem:[%s1 + $0x8] sm:$0xff]
        %v202 = vld [vmem:[%s1 + $0x10] sm:$0xff]
        %v203 = vld [vmem:[%s1 + $0x18] sm:$0xff]
        %v204 = vld [vmem:[%s1 + $0x20] sm:$0xff]
        %v205 = vld [vmem:[%s1 + $0x28] sm:$0xff]
        %v206 = vld [vmem:[%s1 + $0x30] sm:$0xff]
        %v207 = vld [vmem:[%s1 + $0x38] sm:$0xff]
        %v208 = vld [vmem:[%s1 + $0x40] sm:$0xff]
        %v209 = vld [vmem:[%s1 + $0x48] sm:$0xff]
        %v210 = vld [vmem:[%s1 + $0x50] sm:$0xff]
        %v211 = vld [vmem:[%s1 + $0x58] sm:$0xff]
        %v212 = vld [vmem:[%s1 + $0x60] sm:$0xff]
        %v213 = vld [vmem:[%s1 + $0x68] sm:$0xff]
        %v214 = vld [vmem:[%s1 + $0x70] sm:$0xff]
        %v215 = vld [vmem:[%s1 + $0x78] sm:$0xff]
        %v216 = vld [vmem:[%s1 + $0x80] sm:$0xff]
        %v217 = vld [vmem:[%s1 + $0x88] sm:$0xff]
        %v218 = vld [vmem:[%s1 + $0x90] sm:$0xff]
        %v219 = vld [vmem:[%s1 + $0x98] sm:$0xff]
        %v220 = vld [vmem:[%s1 + $0xa0] sm:$0xff]
        %v221 = vld [vmem:[%s1 + $0xa8] sm:$0xff]
        %v222 = vld [vmem:[%s1 + $0xb0] sm:$0xff]
        %v223 = vld [vmem:[%s1 + $0xb8] sm:$0xff]
        %v224 = vld [vmem:[%s1 + $0xc0] sm:$0xff]
        %v225 = vld [vmem:[%s1 + $0xc8] sm:$0xff]
        %v226 = vld [vmem:[%s1 + $0xd0] sm:$0xff]
        %v227 = vld [vmem:[%s1 + $0xd8] sm:$0xff]
        %v228 = vld [vmem:[%s1 + $0xe0] sm:$0xff]
        %v229 = vld [vmem:[%s1 + $0xe8] sm:$0xff]
        %v230 = vld [vmem:[%s1 + $0xf0] sm:$0xff]
        %v231 = vld [vmem:[%s1 + $0xf8] sm:$0xff]
        %v232 = vld [vmem:[%s1 + $0x100] sm:$0xff]
        %v233 = vld [vmem:[%s1 + $0x108] sm:$0xff]
        %v234 = vld [vmem:[%s1 + $0x110] sm:$0xff]
        %v235 = vld [vmem:[%s1 + $0x118] sm:$0xff]
        %v236 = vld [vmem:[%s1 + $0x120] sm:$0xff]
        %v237 = vld [vmem:[%s1 + $0x128] sm:$0xff]
        %v238 = vld [vmem:[%s1 + $0x130] sm:$0xff]
        %v239 = vld [vmem:[%s1 + $0x138] sm:$0xff]
        %v240 = vld [vmem:[%s1 + $0x140] sm:$0xff]
        %v241 = vld [vmem:[%s1 + $0x148] sm:$0xff]
        %v242 = vld [vmem:[%s1 + $0x150] sm:$0xff]
        %v243 = vld [vmem:[%s1 + $0x158] sm:$0xff]
        %v244 = vld [vmem:[%s1 + $0x160] sm:$0xff]
        %v245 = vld [vmem:[%s1 + $0x168] sm:$0xff]
        %v246 = vld [vmem:[%s1 + $0x170] sm:$0xff]
        %v247 = vld [vmem:[%s1 + $0x178] sm:$0xff]
        %v248 = vld [vmem:[%s1 + $0x180] sm:$0xff]
        %v249 = vld [vmem:[%s1 + $0x188] sm:$0xff]
        %v250 = vld [vmem:[%s1 + $0x190] sm:$0xff]
        %v251 = vld [vmem:[%s1 + $0x198] sm:$0xff]
        %v252 = vld [vmem:[%s1 + $0x1a0] sm:$0xff]
        %v253 = vld [vmem:[%s1 + $0x1a8] sm:$0xff]
        %v254 = vld [vmem:[%s1 + $0x1b0] sm:$0xff]
        %v255 = vld [vmem:[%s1 + $0x1b8] sm:$0xff]
        %v256 = vld [vmem:[%s1 + $0x1c0] sm:$0xff]
        %v257 = vld [vmem:[%s1 + $0x1c8] sm:$0xff]
        %v258 = vld [vmem:[%s1 + $0x1d0] sm:$0xff]
        %v259 = vld [vmem:[%s1 + $0x1d8] sm:$0xff]
        %v260 = vld [vmem:[%s1 + $0x1e0] sm:$0xff]
        %v261 = vld [vmem:[%s1 + $0x1e8] sm:$0xff]
        %v262 = vld [vmem:[%s1 + $0x1f0] sm:$0xff]
        %v263 = vld [vmem:[%s1 + $0x1f8] sm:$0xff]
        %v264 = vld [vmem:[%s197] sm:$0xff]
        %v265 = vld [vmem:[%s197 + $0x8] sm:$0xff]
        %v266 = vld [vmem:[%s197 + $0x10] sm:$0xff]
        %v267 = vld [vmem:[%s197 + $0x18] sm:$0xff]
        %v268 = vld [vmem:[%s197 + $0x20] sm:$0xff]
        %v269 = vld [vmem:[%s197 + $0x28] sm:$0xff]
        %v270 = vld [vmem:[%s197 + $0x30] sm:$0xff]
        %v271 = vld [vmem:[%s197 + $0x38] sm:$0xff]
        %v272 = vld [vmem:[%s197 + $0x40] sm:$0xff]
        %v273 = vld [vmem:[%s197 + $0x48] sm:$0xff]
        %v274 = vld [vmem:[%s197 + $0x50] sm:$0xff]
        %v275 = vld [vmem:[%s197 + $0x58] sm:$0xff]
        %v276 = vld [vmem:[%s197 + $0x60] sm:$0xff]
        %v277 = vld [vmem:[%s197 + $0x68] sm:$0xff]
        %v278 = vld [vmem:[%s197 + $0x70] sm:$0xff]
        %v279 = vld [vmem:[%s197 + $0x78] sm:$0xff]
        %v280 = vld [vmem:[%s197 + $0x80] sm:$0xff]
        %v281 = vld [vmem:[%s197 + $0x88] sm:$0xff]
        %v282 = vld [vmem:[%s197 + $0x90] sm:$0xff]
        %v283 = vld [vmem:[%s197 + $0x98] sm:$0xff]
        %v284 = vld [vmem:[%s197 + $0xa0] sm:$0xff]
        %v285 = vld [vmem:[%s197 + $0xa8] sm:$0xff]
        %v286 = vld [vmem:[%s197 + $0xb0] sm:$0xff]
        %v287 = vld [vmem:[%s197 + $0xb8] sm:$0xff]
        %v288 = vld [vmem:[%s197 + $0xc0] sm:$0xff]
        %v289 = vld [vmem:[%s197 + $0xc8] sm:$0xff]
        %v290 = vld [vmem:[%s197 + $0xd0] sm:$0xff]
        %v291 = vld [vmem:[%s197 + $0xd8] sm:$0xff]
        %v292 = vld [vmem:[%s197 + $0xe0] sm:$0xff]
        %v293 = vld [vmem:[%s197 + $0xe8] sm:$0xff]
        %v294 = vld [vmem:[%s197 + $0xf0] sm:$0xff]
        %v295 = vld [vmem:[%s197 + $0xf8] sm:$0xff]
        %v296 = vld [vmem:[%s197 + $0x100] sm:$0xff]
        %v297 = vld [vmem:[%s197 + $0x108] sm:$0xff]
        %v298 = vld [vmem:[%s197 + $0x110] sm:$0xff]
        %v299 = vld [vmem:[%s197 + $0x118] sm:$0xff]
        %v300 = vld [vmem:[%s197 + $0x120] sm:$0xff]
        %v301 = vld [vmem:[%s197 + $0x128] sm:$0xff]
        %v302 = vld [vmem:[%s197 + $0x130] sm:$0xff]
        %v303 = vld [vmem:[%s197 + $0x138] sm:$0xff]
        %v304 = vld [vmem:[%s197 + $0x140] sm:$0xff]
        %v305 = vld [vmem:[%s197 + $0x148] sm:$0xff]
        %v306 = vld [vmem:[%s197 + $0x150] sm:$0xff]
        %v307 = vld [vmem:[%s197 + $0x158] sm:$0xff]
        %v308 = vld [vmem:[%s197 + $0x160] sm:$0xff]
        %v309 = vld [vmem:[%s197 + $0x168] sm:$0xff]
        %v310 = vld [vmem:[%s197 + $0x170] sm:$0xff]
        %v311 = vld [vmem:[%s197 + $0x178] sm:$0xff]
        %v312 = vld [vmem:[%s197 + $0x180] sm:$0xff]
        %v313 = vld [vmem:[%s197 + $0x188] sm:$0xff]
        %v314 = vld [vmem:[%s197 + $0x190] sm:$0xff]
        %v315 = vld [vmem:[%s197 + $0x198] sm:$0xff]
        %v316 = vld [vmem:[%s197 + $0x1a0] sm:$0xff]
        %v317 = vld [vmem:[%s197 + $0x1a8] sm:$0xff]
        %v318 = vld [vmem:[%s197 + $0x1b0] sm:$0xff]
        %v319 = vld [vmem:[%s197 + $0x1b8] sm:$0xff]
        %v320 = vld [vmem:[%s197 + $0x1c0] sm:$0xff]
        %v321 = vld [vmem:[%s197 + $0x1c8] sm:$0xff]
        %v322 = vld [vmem:[%s197 + $0x1d0] sm:$0xff]
        %v323 = vld [vmem:[%s197 + $0x1d8] sm:$0xff]
        %v324 = vld [vmem:[%s197 + $0x1e0] sm:$0xff]
        %v325 = vld [vmem:[%s197 + $0x1e8] sm:$0xff]
        %v326 = vld [vmem:[%s197 + $0x1f0] sm:$0xff]
        %v327 = vld [vmem:[%s197 + $0x1f8] sm:$0xff]
        %v328 = vld [vmem:[%s197 + $0x200] sm:$0xff]
        %v329 = vld [vmem:[%s197 + $0x208] sm:$0xff]
        %v330 = vld [vmem:[%s197 + $0x210] sm:$0xff]
        %v331 = vld [vmem:[%s197 + $0x218] sm:$0xff]
        %v332 = vld [vmem:[%s197 + $0x220] sm:$0xff]
        %v333 = vld [vmem:[%s197 + $0x228] sm:$0xff]
        %v334 = vld [vmem:[%s197 + $0x230] sm:$0xff]
        %v335 = vld [vmem:[%s197 + $0x238] sm:$0xff]
        %v336 = vld [vmem:[%s197 + $0x240] sm:$0xff]
        %v337 = vld [vmem:[%s197 + $0x248] sm:$0xff]
        %v338 = vld [vmem:[%s197 + $0x250] sm:$0xff]
        %v339 = vld [vmem:[%s197 + $0x258] sm:$0xff]
        %v340 = vld [vmem:[%s197 + $0x260] sm:$0xff]
        %v341 = vld [vmem:[%s197 + $0x268] sm:$0xff]
        %v342 = vld [vmem:[%s197 + $0x270] sm:$0xff]
        %v343 = vld [vmem:[%s197 + $0x278] sm:$0xff]
        %v344 = vld [vmem:[%s197 + $0x280] sm:$0xff]
        %v345 = vld [vmem:[%s197 + $0x288] sm:$0xff]
        %v346 = vld [vmem:[%s197 + $0x290] sm:$0xff]
        %v347 = vld [vmem:[%s197 + $0x298] sm:$0xff]
        %v348 = vld [vmem:[%s197 + $0x2a0] sm:$0xff]
        %v349 = vld [vmem:[%s197 + $0x2a8] sm:$0xff]
        %v350 = vld [vmem:[%s197 + $0x2b0] sm:$0xff]
        %v351 = vld [vmem:[%s197 + $0x2b8] sm:$0xff]
        %v352 = vld [vmem:[%s197 + $0x2c0] sm:$0xff]
        %v353 = vld [vmem:[%s197 + $0x2c8] sm:$0xff]
        %v354 = vld [vmem:[%s197 + $0x2d0] sm:$0xff]
        %v355 = vld [vmem:[%s197 + $0x2d8] sm:$0xff]
        %v356 = vld [vmem:[%s197 + $0x2e0] sm:$0xff]
        %v357 = vld [vmem:[%s197 + $0x2e8] sm:$0xff]
        %v358 = vld [vmem:[%s197 + $0x2f0] sm:$0xff]
        %v359 = vld [vmem:[%s197 + $0x2f8] sm:$0xff]
        %v360 = vld [vmem:[%s197 + $0x300] sm:$0xff]
        %v361 = vld [vmem:[%s197 + $0x308] sm:$0xff]
        %v362 = vld [vmem:[%s197 + $0x310] sm:$0xff]
        %v363 = vld [vmem:[%s197 + $0x318] sm:$0xff]
        %v364 = vld [vmem:[%s197 + $0x320] sm:$0xff]
        %v365 = vld [vmem:[%s197 + $0x328] sm:$0xff]
        %v366 = vld [vmem:[%s197 + $0x330] sm:$0xff]
        %v367 = vld [vmem:[%s197 + $0x338] sm:$0xff]
        %v368 = vld [vmem:[%s197 + $0x340] sm:$0xff]
        %v369 = vld [vmem:[%s197 + $0x348] sm:$0xff]
        %v370 = vld [vmem:[%s197 + $0x350] sm:$0xff]
        %v371 = vld [vmem:[%s197 + $0x358] sm:$0xff]
        %v372 = vld [vmem:[%s197 + $0x360] sm:$0xff]
        %v373 = vld [vmem:[%s197 + $0x368] sm:$0xff]
        %v374 = vld [vmem:[%s197 + $0x370] sm:$0xff]
        %v375 = vld [vmem:[%s197 + $0x378] sm:$0xff]
        %v376 = vld [vmem:[%s197 + $0x380] sm:$0xff]
        %v377 = vld [vmem:[%s197 + $0x388] sm:$0xff]
        %v378 = vld [vmem:[%s197 + $0x390] sm:$0xff]
        %v379 = vld [vmem:[%s197 + $0x398] sm:$0xff]
        %v380 = vld [vmem:[%s197 + $0x3a0] sm:$0xff]
        %v381 = vld [vmem:[%s197 + $0x3a8] sm:$0xff]
        %v382 = vld [vmem:[%s197 + $0x3b0] sm:$0xff]
        %v383 = vld [vmem:[%s197 + $0x3b8] sm:$0xff]
        %v384 = vld [vmem:[%s197 + $0x3c0] sm:$0xff]
        %v385 = vld [vmem:[%s197 + $0x3c8] sm:$0xff]
        %v386 = vld [vmem:[%s197 + $0x3d0] sm:$0xff]
        %v387 = vld [vmem:[%s197 + $0x3d8] sm:$0xff]
        %v388 = vld [vmem:[%s197 + $0x3e0] sm:$0xff]
        %v389 = vld [vmem:[%s197 + $0x3e8] sm:$0xff]
        %v390 = vld [vmem:[%s197 + $0x3f0] sm:$0xff]
        %v391 = vld [vmem:[%s197 + $0x3f8] sm:$0xff]
        %v392 = vld [vmem:[%s197 + $0x400] sm:$0xff]
        %v393 = vld [vmem:[%s197 + $0x408] sm:$0xff]
        %v394 = vld [vmem:[%s197 + $0x410] sm:$0xff]
        %v395 = vld [vmem:[%s197 + $0x418] sm:$0xff]
        %v396 = vld [vmem:[%s197 + $0x420] sm:$0xff]
        %v397 = vld [vmem:[%s197 + $0x428] sm:$0xff]
        %v398 = vld [vmem:[%s197 + $0x430] sm:$0xff]
        %v399 = vld [vmem:[%s197 + $0x438] sm:$0xff]
        %v400 = vld [vmem:[%s197 + $0x440] sm:$0xff]
        %v401 = vld [vmem:[%s197 + $0x448] sm:$0xff]
        %v402 = vld [vmem:[%s197 + $0x450] sm:$0xff]
        %v403 = vld [vmem:[%s197 + $0x458] sm:$0xff]
        %v404 = vld [vmem:[%s197 + $0x460] sm:$0xff]
        %v405 = vld [vmem:[%s197 + $0x468] sm:$0xff]
        %v406 = vld [vmem:[%s197 + $0x470] sm:$0xff]
        %v407 = vld [vmem:[%s197 + $0x478] sm:$0xff]
        %v408 = vld [vmem:[%s197 + $0x480] sm:$0xff]
        %v409 = vld [vmem:[%s197 + $0x488] sm:$0xff]
        %v410 = vld [vmem:[%s197 + $0x490] sm:$0xff]
        %v411 = vld [vmem:[%s197 + $0x498] sm:$0xff]
        %v412 = vld [vmem:[%s197 + $0x4a0] sm:$0xff]
        %v413 = vld [vmem:[%s197 + $0x4a8] sm:$0xff]
        %v414 = vld [vmem:[%s197 + $0x4b0] sm:$0xff]
        %v415 = vld [vmem:[%s197 + $0x4b8] sm:$0xff]
        %v416 = vld [vmem:[%s197 + $0x4c0] sm:$0xff]
        %v417 = vld [vmem:[%s197 + $0x4c8] sm:$0xff]
        %v418 = vld [vmem:[%s197 + $0x4d0] sm:$0xff]
        %v419 = vld [vmem:[%s197 + $0x4d8] sm:$0xff]
        %v420 = vld [vmem:[%s197 + $0x4e0] sm:$0xff]
        %v421 = vld [vmem:[%s197 + $0x4e8] sm:$0xff]
        %v422 = vld [vmem:[%s197 + $0x4f0] sm:$0xff]
        %v423 = vld [vmem:[%s197 + $0x4f8] sm:$0xff]
        %v424 = vld [vmem:[%s197 + $0x500] sm:$0xff]
        %v425 = vld [vmem:[%s197 + $0x508] sm:$0xff]
        %v426 = vld [vmem:[%s197 + $0x510] sm:$0xff]
        %v427 = vld [vmem:[%s197 + $0x518] sm:$0xff]
        %v428 = vld [vmem:[%s197 + $0x520] sm:$0xff]
        %v429 = vld [vmem:[%s197 + $0x528] sm:$0xff]
        %v430 = vld [vmem:[%s197 + $0x530] sm:$0xff]
        %v431 = vld [vmem:[%s197 + $0x538] sm:$0xff]
        %v432 = vld [vmem:[%s197 + $0x540] sm:$0xff]
        %v433 = vld [vmem:[%s197 + $0x548] sm:$0xff]
        %v434 = vld [vmem:[%s197 + $0x550] sm:$0xff]
        %v435 = vld [vmem:[%s197 + $0x558] sm:$0xff]
        %v436 = vld [vmem:[%s197 + $0x560] sm:$0xff]
        %v437 = vld [vmem:[%s197 + $0x568] sm:$0xff]
        %v438 = vld [vmem:[%s197 + $0x570] sm:$0xff]
        %v439 = vld [vmem:[%s197 + $0x578] sm:$0xff]
        %v440 = vld [vmem:[%s197 + $0x580] sm:$0xff]
        %v441 = vld [vmem:[%s197 + $0x588] sm:$0xff]
        %v442 = vld [vmem:[%s197 + $0x590] sm:$0xff]
        %v443 = vld [vmem:[%s197 + $0x598] sm:$0xff]
        %v444 = vld [vmem:[%s197 + $0x5a0] sm:$0xff]
        %v445 = vld [vmem:[%s197 + $0x5a8] sm:$0xff]
        %v446 = vld [vmem:[%s197 + $0x5b0] sm:$0xff]
        %v447 = vld [vmem:[%s197 + $0x5b8] sm:$0xff]
        %v448 = vld [vmem:[%s197 + $0x5c0] sm:$0xff]
        %v449 = vld [vmem:[%s197 + $0x5c8] sm:$0xff]
        %v450 = vld [vmem:[%s197 + $0x5d0] sm:$0xff]
        %v451 = vld [vmem:[%s197 + $0x5d8] sm:$0xff]
        %v452 = vld [vmem:[%s197 + $0x5e0] sm:$0xff]
        %v453 = vld [vmem:[%s197 + $0x5e8] sm:$0xff]
        %v454 = vld [vmem:[%s197 + $0x5f0] sm:$0xff]
        %v455 = vld [vmem:[%s197 + $0x5f8] sm:$0xff]
        %v456 = vld [vmem:[%s197 + $0x600] sm:$0xff]
        %v457 = vld [vmem:[%s197 + $0x608] sm:$0xff]
        %v458 = vld [vmem:[%s197 + $0x610] sm:$0xff]
        %v459 = vld [vmem:[%s197 + $0x618] sm:$0xff]
        %v460 = vld [vmem:[%s197 + $0x620] sm:$0xff]
        %v461 = vld [vmem:[%s197 + $0x628] sm:$0xff]
        %v462 = vld [vmem:[%s197 + $0x630] sm:$0xff]
        %v463 = vld [vmem:[%s197 + $0x638] sm:$0xff]
        %v464 = vld [vmem:[%s197 + $0x640] sm:$0xff]
        %v465 = vld [vmem:[%s197 + $0x648] sm:$0xff]
        %v466 = vld [vmem:[%s197 + $0x650] sm:$0xff]
        %v467 = vld [vmem:[%s197 + $0x658] sm:$0xff]
        %v468 = vld [vmem:[%s197 + $0x660] sm:$0xff]
        %v469 = vld [vmem:[%s197 + $0x668] sm:$0xff]
        %v470 = vld [vmem:[%s197 + $0x670] sm:$0xff]
        %v471 = vld [vmem:[%s197 + $0x678] sm:$0xff]
        %v472 = vld [vmem:[%s197 + $0x680] sm:$0xff]
        %v473 = vld [vmem:[%s197 + $0x688] sm:$0xff]
        %v474 = vld [vmem:[%s197 + $0x690] sm:$0xff]
        %v475 = vld [vmem:[%s197 + $0x698] sm:$0xff]
        %v476 = vld [vmem:[%s197 + $0x6a0] sm:$0xff]
        %v477 = vld [vmem:[%s197 + $0x6a8] sm:$0xff]
        %v478 = vld [vmem:[%s197 + $0x6b0] sm:$0xff]
        %v479 = vld [vmem:[%s197 + $0x6b8] sm:$0xff]
        %v480 = vld [vmem:[%s197 + $0x6c0] sm:$0xff]
        %v481 = vld [vmem:[%s197 + $0x6c8] sm:$0xff]
        %v482 = vld [vmem:[%s197 + $0x6d0] sm:$0xff]
        %v483 = vld [vmem:[%s197 + $0x6d8] sm:$0xff]
        %v484 = vld [vmem:[%s197 + $0x6e0] sm:$0xff]
        %v485 = vld [vmem:[%s197 + $0x6e8] sm:$0xff]
        %v486 = vld [vmem:[%s197 + $0x6f0] sm:$0xff]
        %v487 = vld [vmem:[%s197 + $0x6f8] sm:$0xff]
        %v488 = vld [vmem:[%s197 + $0x700] sm:$0xff]
        %v489 = vld [vmem:[%s197 + $0x708] sm:$0xff]
        %v490 = vld [vmem:[%s197 + $0x710] sm:$0xff]
        %v491 = vld [vmem:[%s197 + $0x718] sm:$0xff]
        %v492 = vld [vmem:[%s197 + $0x720] sm:$0xff]
        %v493 = vld [vmem:[%s197 + $0x728] sm:$0xff]
        %v494 = vld [vmem:[%s197 + $0x730] sm:$0xff]
        %v495 = vld [vmem:[%s197 + $0x738] sm:$0xff]
        %v496 = vld [vmem:[%s197 + $0x740] sm:$0xff]
        %v497 = vld [vmem:[%s197 + $0x748] sm:$0xff]
        %v498 = vld [vmem:[%s197 + $0x750] sm:$0xff]
        %v499 = vld [vmem:[%s197 + $0x758] sm:$0xff]
        %v500 = vld [vmem:[%s197 + $0x760] sm:$0xff]
        %v501 = vld [vmem:[%s197 + $0x768] sm:$0xff]
        %v502 = vld [vmem:[%s197 + $0x770] sm:$0xff]
        %v503 = vld [vmem:[%s197 + $0x778] sm:$0xff]
        %v504 = vld [vmem:[%s197 + $0x780] sm:$0xff]
        %v505 = vld [vmem:[%s197 + $0x788] sm:$0xff]
        %v506 = vld [vmem:[%s197 + $0x790] sm:$0xff]
        %v507 = vld [vmem:[%s197 + $0x798] sm:$0xff]
        %v508 = vld [vmem:[%s197 + $0x7a0] sm:$0xff]
        %v509 = vld [vmem:[%s197 + $0x7a8] sm:$0xff]
        %v510 = vld [vmem:[%s197 + $0x7b0] sm:$0xff]
        %v511 = vld [vmem:[%s197 + $0x7b8] sm:$0xff]
        %v512 = vld [vmem:[%s197 + $0x7c0] sm:$0xff]
        %v513 = vld [vmem:[%s197 + $0x7c8] sm:$0xff]
        %v514 = vld [vmem:[%s197 + $0x7d0] sm:$0xff]
        %v515 = vld [vmem:[%s197 + $0x7d8] sm:$0xff]
        %v516 = vld [vmem:[%s197 + $0x7e0] sm:$0xff]
        %v517 = vld [vmem:[%s197 + $0x7e8] sm:$0xff]
        %v518 = vld [vmem:[%s197 + $0x7f0] sm:$0xff]
        %v519 = vld [vmem:[%s197 + $0x7f8] sm:$0xff]
        %v520 = vld [vmem:[%s197 + $0x800] sm:$0xff]
        %v521 = vld [vmem:[%s197 + $0x808] sm:$0xff]
        %v522 = vld [vmem:[%s197 + $0x810] sm:$0xff]
        %v523 = vld [vmem:[%s197 + $0x818] sm:$0xff]
        %v524 = vld [vmem:[%s197 + $0x820] sm:$0xff]
        %v525 = vld [vmem:[%s197 + $0x828] sm:$0xff]
        %v526 = vld [vmem:[%s197 + $0x830] sm:$0xff]
        %v527 = vld [vmem:[%s197 + $0x838] sm:$0xff]
        %v528 = vld [vmem:[%s197 + $0x840] sm:$0xff]
        %v529 = vld [vmem:[%s197 + $0x848] sm:$0xff]
        %v530 = vld [vmem:[%s197 + $0x850] sm:$0xff]
        %v531 = vld [vmem:[%s197 + $0x858] sm:$0xff]
        %v532 = vld [vmem:[%s197 + $0x860] sm:$0xff]
        %v533 = vld [vmem:[%s197 + $0x868] sm:$0xff]
        %v534 = vld [vmem:[%s197 + $0x870] sm:$0xff]
        %v535 = vld [vmem:[%s197 + $0x878] sm:$0xff]
        %v536 = vld [vmem:[%s197 + $0x880] sm:$0xff]
        %v537 = vld [vmem:[%s197 + $0x888] sm:$0xff]
        %v538 = vld [vmem:[%s197 + $0x890] sm:$0xff]
        %v539 = vld [vmem:[%s197 + $0x898] sm:$0xff]
        %v540 = vld [vmem:[%s197 + $0x8a0] sm:$0xff]
        %v541 = vld [vmem:[%s197 + $0x8a8] sm:$0xff]
        %v542 = vld [vmem:[%s197 + $0x8b0] sm:$0xff]
        %v543 = vld [vmem:[%s197 + $0x8b8] sm:$0xff]
        %v544 = vld [vmem:[%s197 + $0x8c0] sm:$0xff]
        %v545 = vld [vmem:[%s197 + $0x8c8] sm:$0xff]
        %v546 = vld [vmem:[%s197 + $0x8d0] sm:$0xff]
        %v547 = vld [vmem:[%s197 + $0x8d8] sm:$0xff]
        %v548 = vld [vmem:[%s197 + $0x8e0] sm:$0xff]
        %v549 = vld [vmem:[%s197 + $0x8e8] sm:$0xff]
        %v550 = vld [vmem:[%s197 + $0x8f0] sm:$0xff]
        %v551 = vld [vmem:[%s197 + $0x8f8] sm:$0xff]
        %v552 = vld [vmem:[%s197 + $0x900] sm:$0xff]
        %v553 = vld [vmem:[%s197 + $0x908] sm:$0xff]
        %v554 = vld [vmem:[%s197 + $0x910] sm:$0xff]
        %v555 = vld [vmem:[%s197 + $0x918] sm:$0xff]
        %v556 = vld [vmem:[%s197 + $0x920] sm:$0xff]
        %v557 = vld [vmem:[%s197 + $0x928] sm:$0xff]
        %v558 = vld [vmem:[%s197 + $0x930] sm:$0xff]
        %v559 = vld [vmem:[%s197 + $0x938] sm:$0xff]
        %v560 = vld [vmem:[%s197 + $0x940] sm:$0xff]
        %v561 = vld [vmem:[%s197 + $0x948] sm:$0xff]
        %v562 = vld [vmem:[%s197 + $0x950] sm:$0xff]
        %v563 = vld [vmem:[%s197 + $0x958] sm:$0xff]
        %v564 = vld [vmem:[%s197 + $0x960] sm:$0xff]
        %v565 = vld [vmem:[%s197 + $0x968] sm:$0xff]
        %v566 = vld [vmem:[%s197 + $0x970] sm:$0xff]
        %v567 = vld [vmem:[%s197 + $0x978] sm:$0xff]
        %v568 = vld [vmem:[%s197 + $0x980] sm:$0xff]
        %v569 = vld [vmem:[%s197 + $0x988] sm:$0xff]
        %v570 = vld [vmem:[%s197 + $0x990] sm:$0xff]
        %v571 = vld [vmem:[%s197 + $0x998] sm:$0xff]
        %v572 = vld [vmem:[%s197 + $0x9a0] sm:$0xff]
        %v573 = vld [vmem:[%s197 + $0x9a8] sm:$0xff]
        %v574 = vld [vmem:[%s197 + $0x9b0] sm:$0xff]
        %v575 = vld [vmem:[%s197 + $0x9b8] sm:$0xff]
        %v576 = vld [vmem:[%s197 + $0x9c0] sm:$0xff]
        %v577 = vld [vmem:[%s197 + $0x9c8] sm:$0xff]
        %v578 = vld [vmem:[%s197 + $0x9d0] sm:$0xff]
        %v579 = vld [vmem:[%s197 + $0x9d8] sm:$0xff]
        %v580 = vld [vmem:[%s197 + $0x9e0] sm:$0xff]
        %v581 = vld [vmem:[%s197 + $0x9e8] sm:$0xff]
        %v582 = vld [vmem:[%s197 + $0x9f0] sm:$0xff]
        %v583 = vld [vmem:[%s197 + $0x9f8] sm:$0xff]
        %v584 = vld [vmem:[%s197 + $0xa00] sm:$0xff]
        %v585 = vld [vmem:[%s197 + $0xa08] sm:$0xff]
        %v586 = vld [vmem:[%s197 + $0xa10] sm:$0xff]
        %v587 = vld [vmem:[%s197 + $0xa18] sm:$0xff]
        %v588 = vld [vmem:[%s197 + $0xa20] sm:$0xff]
        %v589 = vld [vmem:[%s197 + $0xa28] sm:$0xff]
        %v590 = vld [vmem:[%s197 + $0xa30] sm:$0xff]
        %v591 = vld [vmem:[%s197 + $0xa38] sm:$0xff]
        %v592 = vld [vmem:[%s197 + $0xa40] sm:$0xff]
        %v593 = vld [vmem:[%s197 + $0xa48] sm:$0xff]
        %v594 = vld [vmem:[%s197 + $0xa50] sm:$0xff]
        %v595 = vld [vmem:[%s197 + $0xa58] sm:$0xff]
        %v596 = vld [vmem:[%s197 + $0xa60] sm:$0xff]
        %v597 = vld [vmem:[%s197 + $0xa68] sm:$0xff]
        %v598 = vld [vmem:[%s197 + $0xa70] sm:$0xff]
        %v599 = vld [vmem:[%s197 + $0xa78] sm:$0xff]
        %v600 = vld [vmem:[%s197 + $0xa80] sm:$0xff]
        %v601 = vld [vmem:[%s197 + $0xa88] sm:$0xff]
        %v602 = vld [vmem:[%s197 + $0xa90] sm:$0xff]
        %v603 = vld [vmem:[%s197 + $0xa98] sm:$0xff]
        %v604 = vld [vmem:[%s197 + $0xaa0] sm:$0xff]
        %v605 = vld [vmem:[%s197 + $0xaa8] sm:$0xff]
        %v606 = vld [vmem:[%s197 + $0xab0] sm:$0xff]
        %v607 = vld [vmem:[%s197 + $0xab8] sm:$0xff]
        %v608 = vld [vmem:[%s197 + $0xac0] sm:$0xff]
        %v609 = vld [vmem:[%s197 + $0xac8] sm:$0xff]
        %v610 = vld [vmem:[%s197 + $0xad0] sm:$0xff]
        %v611 = vld [vmem:[%s197 + $0xad8] sm:$0xff]
        %v612 = vld [vmem:[%s197 + $0xae0] sm:$0xff]
        %v613 = vld [vmem:[%s197 + $0xae8] sm:$0xff]
        %v614 = vld [vmem:[%s197 + $0xaf0] sm:$0xff]
        %v615 = vld [vmem:[%s197 + $0xaf8] sm:$0xff]
        %v616 = vld [vmem:[%s197 + $0xb00] sm:$0xff]
        %v617 = vld [vmem:[%s197 + $0xb08] sm:$0xff]
        %v618 = vld [vmem:[%s197 + $0xb10] sm:$0xff]
        %v619 = vld [vmem:[%s197 + $0xb18] sm:$0xff]
        %v620 = vld [vmem:[%s197 + $0xb20] sm:$0xff]
        %v621 = vld [vmem:[%s197 + $0xb28] sm:$0xff]
        %v622 = vld [vmem:[%s197 + $0xb30] sm:$0xff]
        %v623 = vld [vmem:[%s197 + $0xb38] sm:$0xff]
        %v624 = vld [vmem:[%s197 + $0xb40] sm:$0xff]
        %v625 = vld [vmem:[%s197 + $0xb48] sm:$0xff]
        %v626 = vld [vmem:[%s197 + $0xb50] sm:$0xff]
        %v627 = vld [vmem:[%s197 + $0xb58] sm:$0xff]
        %v628 = vld [vmem:[%s197 + $0xb60] sm:$0xff]
        %v629 = vld [vmem:[%s197 + $0xb68] sm:$0xff]
        %v630 = vld [vmem:[%s197 + $0xb70] sm:$0xff]
        %v631 = vld [vmem:[%s197 + $0xb78] sm:$0xff]
        %v632 = vld [vmem:[%s197 + $0xb80] sm:$0xff]
        %v633 = vld [vmem:[%s197 + $0xb88] sm:$0xff]
        %v634 = vld [vmem:[%s197 + $0xb90] sm:$0xff]
        %v635 = vld [vmem:[%s197 + $0xb98] sm:$0xff]
        %v636 = vld [vmem:[%s197 + $0xba0] sm:$0xff]
        %v637 = vld [vmem:[%s197 + $0xba8] sm:$0xff]
        %v638 = vld [vmem:[%s197 + $0xbb0] sm:$0xff]
        %v639 = vld [vmem:[%s197 + $0xbb8] sm:$0xff]
        %v640 = vld [vmem:[%s197 + $0xbc0] sm:$0xff]
        %v641 = vld [vmem:[%s197 + $0xbc8] sm:$0xff]
        %v642 = vld [vmem:[%s197 + $0xbd0] sm:$0xff]
        %v643 = vld [vmem:[%s197 + $0xbd8] sm:$0xff]
        %v644 = vld [vmem:[%s197 + $0xbe0] sm:$0xff]
        %v645 = vld [vmem:[%s197 + $0xbe8] sm:$0xff]
        %v646 = vld [vmem:[%s197 + $0xbf0] sm:$0xff]
        %v647 = vld [vmem:[%s197 + $0xbf8] sm:$0xff]
        %v648 = vld [vmem:[%s197 + $0xc00] sm:$0xff]
        %v649 = vld [vmem:[%s197 + $0xc08] sm:$0xff]
        %v650 = vld [vmem:[%s197 + $0xc10] sm:$0xff]
        %v651 = vld [vmem:[%s197 + $0xc18] sm:$0xff]
        %v652 = vld [vmem:[%s197 + $0xc20] sm:$0xff]
        %v653 = vld [vmem:[%s197 + $0xc28] sm:$0xff]
        %v654 = vld [vmem:[%s197 + $0xc30] sm:$0xff]
        %v655 = vld [vmem:[%s197 + $0xc38] sm:$0xff]
        %v656 = vld [vmem:[%s197 + $0xc40] sm:$0xff]
        %v657 = vld [vmem:[%s197 + $0xc48] sm:$0xff]
        %v658 = vld [vmem:[%s197 + $0xc50] sm:$0xff]
        %v659 = vld [vmem:[%s197 + $0xc58] sm:$0xff]
        %v660 = vld [vmem:[%s197 + $0xc60] sm:$0xff]
        %v661 = vld [vmem:[%s197 + $0xc68] sm:$0xff]
        %v662 = vld [vmem:[%s197 + $0xc70] sm:$0xff]
        %v663 = vld [vmem:[%s197 + $0xc78] sm:$0xff]
        %v664 = vld [vmem:[%s197 + $0xc80] sm:$0xff]
        %v665 = vld [vmem:[%s197 + $0xc88] sm:$0xff]
        %v666 = vld [vmem:[%s197 + $0xc90] sm:$0xff]
        %v667 = vld [vmem:[%s197 + $0xc98] sm:$0xff]
        %v668 = vld [vmem:[%s197 + $0xca0] sm:$0xff]
        %v669 = vld [vmem:[%s197 + $0xca8] sm:$0xff]
        %v670 = vld [vmem:[%s197 + $0xcb0] sm:$0xff]
        %v671 = vld [vmem:[%s197 + $0xcb8] sm:$0xff]
        %v672 = vld [vmem:[%s197 + $0xcc0] sm:$0xff]
        %v673 = vld [vmem:[%s197 + $0xcc8] sm:$0xff]
        %v674 = vld [vmem:[%s197 + $0xcd0] sm:$0xff]
        %v675 = vld [vmem:[%s197 + $0xcd8] sm:$0xff]
        %v676 = vld [vmem:[%s197 + $0xce0] sm:$0xff]
        %v677 = vld [vmem:[%s197 + $0xce8] sm:$0xff]
        %v678 = vld [vmem:[%s197 + $0xcf0] sm:$0xff]
        %v679 = vld [vmem:[%s197 + $0xcf8] sm:$0xff]
        %v680 = vld [vmem:[%s197 + $0xd00] sm:$0xff]
        %v681 = vld [vmem:[%s197 + $0xd08] sm:$0xff]
        %v682 = vld [vmem:[%s197 + $0xd10] sm:$0xff]
        %v683 = vld [vmem:[%s197 + $0xd18] sm:$0xff]
        %v684 = vld [vmem:[%s197 + $0xd20] sm:$0xff]
        %v685 = vld [vmem:[%s197 + $0xd28] sm:$0xff]
        %v686 = vld [vmem:[%s197 + $0xd30] sm:$0xff]
        %v687 = vld [vmem:[%s197 + $0xd38] sm:$0xff]
        %v688 = vld [vmem:[%s197 + $0xd40] sm:$0xff]
        %v689 = vld [vmem:[%s197 + $0xd48] sm:$0xff]
        %v690 = vld [vmem:[%s197 + $0xd50] sm:$0xff]
        %v691 = vld [vmem:[%s197 + $0xd58] sm:$0xff]
        %v692 = vld [vmem:[%s197 + $0xd60] sm:$0xff]
        %v693 = vld [vmem:[%s197 + $0xd68] sm:$0xff]
        %v694 = vld [vmem:[%s197 + $0xd70] sm:$0xff]
        %v695 = vld [vmem:[%s197 + $0xd78] sm:$0xff]
        %v696 = vld [vmem:[%s197 + $0xd80] sm:$0xff]
        %v697 = vld [vmem:[%s197 + $0xd88] sm:$0xff]
        %v698 = vld [vmem:[%s197 + $0xd90] sm:$0xff]
        %v699 = vld [vmem:[%s197 + $0xd98] sm:$0xff]
        %v700 = vld [vmem:[%s197 + $0xda0] sm:$0xff]
        %v701 = vld [vmem:[%s197 + $0xda8] sm:$0xff]
        %v702 = vld [vmem:[%s197 + $0xdb0] sm:$0xff]
        %v703 = vld [vmem:[%s197 + $0xdb8] sm:$0xff]
        %v704 = vld [vmem:[%s197 + $0xdc0] sm:$0xff]
        %v705 = vld [vmem:[%s197 + $0xdc8] sm:$0xff]
        %v706 = vld [vmem:[%s197 + $0xdd0] sm:$0xff]
        %v707 = vld [vmem:[%s197 + $0xdd8] sm:$0xff]
        %v708 = vld [vmem:[%s197 + $0xde0] sm:$0xff]
        %v709 = vld [vmem:[%s197 + $0xde8] sm:$0xff]
        %v710 = vld [vmem:[%s197 + $0xdf0] sm:$0xff]
        %v711 = vld [vmem:[%s197 + $0xdf8] sm:$0xff]
        %v712 = vld [vmem:[%s197 + $0xe00] sm:$0xff]
        %v713 = vld [vmem:[%s197 + $0xe08] sm:$0xff]
        %v714 = vld [vmem:[%s197 + $0xe10] sm:$0xff]
        %v715 = vld [vmem:[%s197 + $0xe18] sm:$0xff]
        %v716 = vld [vmem:[%s197 + $0xe20] sm:$0xff]
        %v717 = vld [vmem:[%s197 + $0xe28] sm:$0xff]
        %v718 = vld [vmem:[%s197 + $0xe30] sm:$0xff]
        %v719 = vld [vmem:[%s197 + $0xe38] sm:$0xff]
        %v720 = vld [vmem:[%s197 + $0xe40] sm:$0xff]
        %v721 = vld [vmem:[%s197 + $0xe48] sm:$0xff]
        %v722 = vld [vmem:[%s197 + $0xe50] sm:$0xff]
        %v723 = vld [vmem:[%s197 + $0xe58] sm:$0xff]
        %v724 = vld [vmem:[%s197 + $0xe60] sm:$0xff]
        %v725 = vld [vmem:[%s197 + $0xe68] sm:$0xff]
        %v726 = vld [vmem:[%s197 + $0xe70] sm:$0xff]
        %v727 = vld [vmem:[%s197 + $0xe78] sm:$0xff]
        %v728 = vld [vmem:[%s197 + $0xe80] sm:$0xff]
        %v729 = vld [vmem:[%s197 + $0xe88] sm:$0xff]
        %v730 = vld [vmem:[%s197 + $0xe90] sm:$0xff]
        %v731 = vld [vmem:[%s197 + $0xe98] sm:$0xff]
        %v732 = vld [vmem:[%s197 + $0xea0] sm:$0xff]
        %v733 = vld [vmem:[%s197 + $0xea8] sm:$0xff]
        %v734 = vld [vmem:[%s197 + $0xeb0] sm:$0xff]
        %v735 = vld [vmem:[%s197 + $0xeb8] sm:$0xff]
        %v736 = vld [vmem:[%s197 + $0xec0] sm:$0xff]
        %v737 = vld [vmem:[%s197 + $0xec8] sm:$0xff]
        %v738 = vld [vmem:[%s197 + $0xed0] sm:$0xff]
        %v739 = vld [vmem:[%s197 + $0xed8] sm:$0xff]
        %v740 = vld [vmem:[%s197 + $0xee0] sm:$0xff]
        %v741 = vld [vmem:[%s197 + $0xee8] sm:$0xff]
        %v742 = vld [vmem:[%s197 + $0xef0] sm:$0xff]
        %v743 = vld [vmem:[%s197 + $0xef8] sm:$0xff]
        %v744 = vld [vmem:[%s197 + $0xf00] sm:$0xff]
        %v745 = vld [vmem:[%s197 + $0xf08] sm:$0xff]
        %v746 = vld [vmem:[%s197 + $0xf10] sm:$0xff]
        %v747 = vld [vmem:[%s197 + $0xf18] sm:$0xff]
        %v748 = vld [vmem:[%s197 + $0xf20] sm:$0xff]
        %v749 = vld [vmem:[%s197 + $0xf28] sm:$0xff]
        %v750 = vld [vmem:[%s197 + $0xf30] sm:$0xff]
        %v751 = vld [vmem:[%s197 + $0xf38] sm:$0xff]
        %v752 = vld [vmem:[%s197 + $0xf40] sm:$0xff]
        %v753 = vld [vmem:[%s197 + $0xf48] sm:$0xff]
        %v754 = vld [vmem:[%s197 + $0xf50] sm:$0xff]
        %v755 = vld [vmem:[%s197 + $0xf58] sm:$0xff]
        %v756 = vld [vmem:[%s197 + $0xf60] sm:$0xff]
        %v757 = vld [vmem:[%s197 + $0xf68] sm:$0xff]
        %v758 = vld [vmem:[%s197 + $0xf70] sm:$0xff]
        %v759 = vld [vmem:[%s197 + $0xf78] sm:$0xff]
        %v760 = vld [vmem:[%s197 + $0xf80] sm:$0xff]
        %v761 = vld [vmem:[%s197 + $0xf88] sm:$0xff]
        %v762 = vld [vmem:[%s197 + $0xf90] sm:$0xff]
        %v763 = vld [vmem:[%s197 + $0xf98] sm:$0xff]
        %v764 = vld [vmem:[%s197 + $0xfa0] sm:$0xff]
        %v765 = vld [vmem:[%s197 + $0xfa8] sm:$0xff]
        %v766 = vld [vmem:[%s197 + $0xfb0] sm:$0xff]
        %v767 = vld [vmem:[%s197 + $0xfb8] sm:$0xff]
        %v768 = vld [vmem:[%s197 + $0xfc0] sm:$0xff]
        %v769 = vld [vmem:[%s197 + $0xfc8] sm:$0xff]
        %v770 = vld [vmem:[%s197 + $0xfd0] sm:$0xff]
        %v771 = vld [vmem:[%s197 + $0xfd8] sm:$0xff]
        %v772 = vld [vmem:[%s197 + $0xfe0] sm:$0xff]
        %v773 = vld [vmem:[%s197 + $0xfe8] sm:$0xff]
        %v774 = vld [vmem:[%s197 + $0xff0] sm:$0xff]
        %v775 = vld [vmem:[%s197 + $0xff8] sm:$0xff]
        %v776 = vld [vmem:[%s2] sm:$0xff]
        %v777 = vld [vmem:[%s2 + $0x8] sm:$0xff]
        %v778 = vld [vmem:[%s2 + $0x10] sm:$0xff]
        %v779 = vld [vmem:[%s2 + $0x18] sm:$0xff]
        %781 = vset.pattern.permute.xlu0 0
        %782 = vperm.xlu0 %781, %v776
        %v783 = vpop.permute.xlu0 %782
        %786 = vset.pattern.permute.xlu0 0
        %787 = vperm.xlu0 %786, %v777
        %v788 = vpop.permute.xlu0 %787
        %791 = vset.pattern.permute.xlu0 0
        %792 = vperm.xlu0 %791, %v778
        %v793 = vpop.permute.xlu0 %792
        %796 = vset.pattern.permute.xlu0 0
        %797 = vperm.xlu0 %796, %v779
        %v798 = vpop.permute.xlu0 %797
        %800 = vmatprep.subr.mxu0 %v265
        %801 = vmatpush1.msra.mxu0 %v264
        %802 = vmatprep.subr.mxu0 %v267
        %803 = vmatpush1.msra.mxu0 %v266
        %804 = vmatprep.subr.mxu0 %v269
        %805 = vmatpush1.msra.mxu0 %v268
        %806 = vmatprep.subr.mxu0 %v271
        %807 = vmatpush1.msra.mxu0 %v270
        %808 = vmatprep.subr.mxu0 %v273
        %809 = vmatpush1.msra.mxu0 %v272
        %810 = vmatprep.subr.mxu0 %v275
        %811 = vmatpush1.msra.mxu0 %v274
        %812 = vmatprep.subr.mxu0 %v277
        %813 = vmatpush1.msra.mxu0 %v276
        %814 = vmatprep.subr.mxu0 %v279
        %815 = vmatpush1.msra.mxu0 %v278
        %816 = vmatprep.subr.mxu0 %v281
        %817 = vmatpush1.msra.mxu0 %v280
        %818 = vmatprep.subr.mxu0 %v283
        %819 = vmatpush1.msra.mxu0 %v282
        %820 = vmatprep.subr.mxu0 %v285
        %821 = vmatpush1.msra.mxu0 %v284
        %822 = vmatprep.subr.mxu0 %v287
        %823 = vmatpush1.msra.mxu0 %v286
        %824 = vmatprep.subr.mxu0 %v289
        %825 = vmatpush1.msra.mxu0 %v288
        %826 = vmatprep.subr.mxu0 %v291
        %827 = vmatpush1.msra.mxu0 %v290
        %828 = vmatprep.subr.mxu0 %v293
        %829 = vmatpush1.msra.mxu0 %v292
        %830 = vmatprep.subr.mxu0 %v295
        %831 = vmatpush1.msra.mxu0 %v294
        %832 = vmatprep.subr.mxu0 %v297
        %833 = vmatpush1.msra.mxu0 %v296
        %834 = vmatprep.subr.mxu0 %v299
        %835 = vmatpush1.msra.mxu0 %v298
        %836 = vmatprep.subr.mxu0 %v301
        %837 = vmatpush1.msra.mxu0 %v300
        %838 = vmatprep.subr.mxu0 %v303
        %839 = vmatpush1.msra.mxu0 %v302
        %840 = vmatprep.subr.mxu0 %v305
        %841 = vmatpush1.msra.mxu0 %v304
        %842 = vmatprep.subr.mxu0 %v307
        %843 = vmatpush1.msra.mxu0 %v306
        %844 = vmatprep.subr.mxu0 %v309
        %845 = vmatpush1.msra.mxu0 %v308
        %846 = vmatprep.subr.mxu0 %v311
        %847 = vmatpush1.msra.mxu0 %v310
        %848 = vmatprep.subr.mxu0 %v313
        %849 = vmatpush1.msra.mxu0 %v312
        %850 = vmatprep.subr.mxu0 %v315
        %851 = vmatpush1.msra.mxu0 %v314
        %852 = vmatprep.subr.mxu0 %v317
        %853 = vmatpush1.msra.mxu0 %v316
        %854 = vmatprep.subr.mxu0 %v319
        %855 = vmatpush1.msra.mxu0 %v318
        %856 = vmatprep.subr.mxu0 %v321
        %857 = vmatpush1.msra.mxu0 %v320
        %858 = vmatprep.subr.mxu0 %v323
        %859 = vmatpush1.msra.mxu0 %v322
        %860 = vmatprep.subr.mxu0 %v325
        %861 = vmatpush1.msra.mxu0 %v324
        %862 = vmatprep.subr.mxu0 %v327
        %863 = vmatpush1.msra.mxu0 %v326
        %864 = vmatprep.mubr.f32.mxu0 %v201
        %865 = vmatmul.mubr.f32.gmra.mrb[0].mxu0 %v200
        %v866 = vpop.f32.mrb[0].mxu0
        %v867 = vadd.f32 %v783, %v866
        %v868 = vpop.f32.mrb[0].mxu0
        %v869 = vadd.f32 %v783, %v868
        %870 = vmatprep.mubr.f32.mxu0 %v217
        %871 = vmatmul.mubr.f32.gmra.mrb[0].mxu0 %v216
        %v872 = vpop.f32.mrb[0].mxu0
        %v873 = vadd.f32 %v788, %v872
        %v874 = vpop.f32.mrb[0].mxu0
        %v875 = vadd.f32 %v788, %v874
        %876 = vmatprep.mubr.f32.mxu0 %v233
        %877 = vmatmul.mubr.f32.gmra.mrb[0].mxu0 %v232
        %v878 = vpop.f32.mrb[0].mxu0
        %v879 = vadd.f32 %v793, %v878
        %v880 = vpop.f32.mrb[0].mxu0
        %v881 = vadd.f32 %v793, %v880
        %882 = vmatprep.mubr.f32.mxu0 %v249
        %883 = vmatmul.mubr.f32.gmra.mrb[0].mxu0 %v248
        %v884 = vpop.f32.mrb[0].mxu0
        %v885 = vadd.f32 %v798, %v884
        %v886 = vpop.f32.mrb[0].mxu0
        %v887 = vadd.f32 %v798, %v886
        %888 = vdwg.mxu0
        %889 = vmatprep.subr.mxu0 %v329
        %890 = vmatpush1.msra.mxu0 %v328
        %891 = vmatprep.subr.mxu0 %v331
        %892 = vmatpush1.msra.mxu0 %v330
        %893 = vmatprep.subr.mxu0 %v333
        %894 = vmatpush1.msra.mxu0 %v332
        %895 = vmatprep.subr.mxu0 %v335
        %896 = vmatpush1.msra.mxu0 %v334
        %897 = vmatprep.subr.mxu0 %v337
        %898 = vmatpush1.msra.mxu0 %v336
        %899 = vmatprep.subr.mxu0 %v339
        %900 = vmatpush1.msra.mxu0 %v338
        %901 = vmatprep.subr.mxu0 %v341
        %902 = vmatpush1.msra.mxu0 %v340
        %903 = vmatprep.subr.mxu0 %v343
        %904 = vmatpush1.msra.mxu0 %v342
        %905 = vmatprep.subr.mxu0 %v345
        %906 = vmatpush1.msra.mxu0 %v344
        %907 = vmatprep.subr.mxu0 %v347
        %908 = vmatpush1.msra.mxu0 %v346
        %909 = vmatprep.subr.mxu0 %v349
        %910 = vmatpush1.msra.mxu0 %v348
        %911 = vmatprep.subr.mxu0 %v351
        %912 = vmatpush1.msra.mxu0 %v350
        %913 = vmatprep.subr.mxu0 %v353
        %914 = vmatpush1.msra.mxu0 %v352
        %915 = vmatprep.subr.mxu0 %v355
        %916 = vmatpush1.msra.mxu0 %v354
        %917 = vmatprep.subr.mxu0 %v357
        %918 = vmatpush1.msra.mxu0 %v356
        %919 = vmatprep.subr.mxu0 %v359
        %920 = vmatpush1.msra.mxu0 %v358
        %921 = vmatprep.subr.mxu0 %v361
        %922 = vmatpush1.msra.mxu0 %v360
        %923 = vmatprep.subr.mxu0 %v363
        %924 = vmatpush1.msra.mxu0 %v362
        %925 = vmatprep.subr.mxu0 %v365
        %926 = vmatpush1.msra.mxu0 %v364
        %927 = vmatprep.subr.mxu0 %v367
        %928 = vmatpush1.msra.mxu0 %v366
        %929 = vmatprep.subr.mxu0 %v369
        %930 = vmatpush1.msra.mxu0 %v368
        %931 = vmatprep.subr.mxu0 %v371
        %932 = vmatpush1.msra.mxu0 %v370
        %933 = vmatprep.subr.mxu0 %v373
        %934 = vmatpush1.msra.mxu0 %v372
        %935 = vmatprep.subr.mxu0 %v375
        %936 = vmatpush1.msra.mxu0 %v374
        %937 = vmatprep.subr.mxu0 %v377
        %938 = vmatpush1.msra.mxu0 %v376
        %939 = vmatprep.subr.mxu0 %v379
        %940 = vmatpush1.msra.mxu0 %v378
        %941 = vmatprep.subr.mxu0 %v381
        %942 = vmatpush1.msra.mxu0 %v380
        %943 = vmatprep.subr.mxu0 %v383
        %944 = vmatpush1.msra.mxu0 %v382
        %945 = vmatprep.subr.mxu0 %v385
        %946 = vmatpush1.msra.mxu0 %v384
        %947 = vmatprep.subr.mxu0 %v387
        %948 = vmatpush1.msra.mxu0 %v386
        %949 = vmatprep.subr.mxu0 %v389
        %950 = vmatpush1.msra.mxu0 %v388
        %951 = vmatprep.subr.mxu0 %v391
        %952 = vmatpush1.msra.mxu0 %v390
        %953 = vmatprep.mubr.f32.mxu0 %v203
        %954 = vmatmul.mubr.f32.gmra.mrb[0].mxu0 %v202
        %v955 = vpop.f32.mrb[0].mxu0
        %v956 = vadd.f32 %v867, %v955
        %v957 = vpop.f32.mrb[0].mxu0
        %v958 = vadd.f32 %v869, %v957
        %959 = vmatprep.mubr.f32.mxu0 %v219
        %960 = vmatmul.mubr.f32.gmra.mrb[0].mxu0 %v218
        %v961 = vpop.f32.mrb[0].mxu0
        %v962 = vadd.f32 %v873, %v961
        %v963 = vpop.f32.mrb[0].mxu0
        %v964 = vadd.f32 %v875, %v963
        %965 = vmatprep.mubr.f32.mxu0 %v235
        %966 = vmatmul.mubr.f32.gmra.mrb[0].mxu0 %v234
        %v967 = vpop.f32.mrb[0].mxu0
        %v968 = vadd.f32 %v879, %v967
        %v969 = vpop.f32.mrb[0].mxu0
        %v970 = vadd.f32 %v881, %v969
        %971 = vmatprep.mubr.f32.mxu0 %v251
        %972 = vmatmul.mubr.f32.gmra.mrb[0].mxu0 %v250
        %v973 = vpop.f32.mrb[0].mxu0
        %v974 = vadd.f32 %v885, %v973
        %v975 = vpop.f32.mrb[0].mxu0
        %v976 = vadd.f32 %v887, %v975
        %977 = vdwg.mxu0
        %978 = vmatprep.subr.mxu0 %v393
        %979 = vmatpush1.msra.mxu0 %v392
        %980 = vmatprep.subr.mxu0 %v395
        %981 = vmatpush1.msra.mxu0 %v394
        %982 = vmatprep.subr.mxu0 %v397
        %983 = vmatpush1.msra.mxu0 %v396
        %984 = vmatprep.subr.mxu0 %v399
        %985 = vmatpush1.msra.mxu0 %v398
        %986 = vmatprep.subr.mxu0 %v401
        %987 = vmatpush1.msra.mxu0 %v400
        %988 = vmatprep.subr.mxu0 %v403
        %989 = vmatpush1.msra.mxu0 %v402
        %990 = vmatprep.subr.mxu0 %v405
        %991 = vmatpush1.msra.mxu0 %v404
        %992 = vmatprep.subr.mxu0 %v407
        %993 = vmatpush1.msra.mxu0 %v406
        %994 = vmatprep.subr.mxu0 %v409
        %995 = vmatpush1.msra.mxu0 %v408
        %996 = vmatprep.subr.mxu0 %v411
        %997 = vmatpush1.msra.mxu0 %v410
        %998 = vmatprep.subr.mxu0 %v413
        %999 = vmatpush1.msra.mxu0 %v412
        %1000 = vmatprep.subr.mxu0 %v415
        %1001 = vmatpush1.msra.mxu0 %v414
        %1002 = vmatprep.subr.mxu0 %v417
        %1003 = vmatpush1.msra.mxu0 %v416
        %1004 = vmatprep.subr.mxu0 %v419
        %1005 = vmatpush1.msra.mxu0 %v418
        %1006 = vmatprep.subr.mxu0 %v421
        %1007 = vmatpush1.msra.mxu0 %v420
        %1008 = vmatprep.subr.mxu0 %v423
        %1009 = vmatpush1.msra.mxu0 %v422
        %1010 = vmatprep.subr.mxu0 %v425
        %1011 = vmatpush1.msra.mxu0 %v424
        %1012 = vmatprep.subr.mxu0 %v427
        %1013 = vmatpush1.msra.mxu0 %v426
        %1014 = vmatprep.subr.mxu0 %v429
        %1015 = vmatpush1.msra.mxu0 %v428
        %1016 = vmatprep.subr.mxu0 %v431
        %1017 = vmatpush1.msra.mxu0 %v430
        %1018 = vmatprep.subr.mxu0 %v433
        %1019 = vmatpush1.msra.mxu0 %v432
        %1020 = vmatprep.subr.mxu0 %v435
        %1021 = vmatpush1.msra.mxu0 %v434
        %1022 = vmatprep.subr.mxu0 %v437
        %1023 = vmatpush1.msra.mxu0 %v436
        %1024 = vmatprep.subr.mxu0 %v439
        %1025 = vmatpush1.msra.mxu0 %v438
        %1026 = vmatprep.subr.mxu0 %v441
        %1027 = vmatpush1.msra.mxu0 %v440
        %1028 = vmatprep.subr.mxu0 %v443
        %1029 = vmatpush1.msra.mxu0 %v442
        %1030 = vmatprep.subr.mxu0 %v445
        %1031 = vmatpush1.msra.mxu0 %v444
        %1032 = vmatprep.subr.mxu0 %v447
        %1033 = vmatpush1.msra.mxu0 %v446
        %1034 = vmatprep.subr.mxu0 %v449
        %1035 = vmatpush1.msra.mxu0 %v448
        %1036 = vmatprep.subr.mxu0 %v451
        %1037 = vmatpush1.msra.mxu0 %v450
        %1038 = vmatprep.subr.mxu0 %v453
        %1039 = vmatpush1.msra.mxu0 %v452
        %1040 = vmatprep.subr.mxu0 %v455
        %1041 = vmatpush1.msra.mxu0 %v454
        %1042 = vmatprep.mubr.f32.mxu0 %v205
        %1043 = vmatmul.mubr.f32.gmra.mrb[0].mxu0 %v204
        %v1044 = vpop.f32.mrb[0].mxu0
        %v1045 = vadd.f32 %v956, %v1044
        %v1046 = vpop.f32.mrb[0].mxu0
        %v1047 = vadd.f32 %v958, %v1046
        %1048 = vmatprep.mubr.f32.mxu0 %v221
        %1049 = vmatmul.mubr.f32.gmra.mrb[0].mxu0 %v220
        %v1050 = vpop.f32.mrb[0].mxu0
        %v1051 = vadd.f32 %v962, %v1050
        %v1052 = vpop.f32.mrb[0].mxu0
        %v1053 = vadd.f32 %v964, %v1052
        %1054 = vmatprep.mubr.f32.mxu0 %v237
        %1055 = vmatmul.mubr.f32.gmra.mrb[0].mxu0 %v236
        %v1056 = vpop.f32.mrb[0].mxu0
        %v1057 = vadd.f32 %v968, %v1056
        %v1058 = vpop.f32.mrb[0].mxu0
        %v1059 = vadd.f32 %v970, %v1058
        %1060 = vmatprep.mubr.f32.mxu0 %v253
        %1061 = vmatmul.mubr.f32.gmra.mrb[0].mxu0 %v252
        %v1062 = vpop.f32.mrb[0].mxu0
        %v1063 = vadd.f32 %v974, %v1062
        %v1064 = vpop.f32.mrb[0].mxu0
        %v1065 = vadd.f32 %v976, %v1064
        %1066 = vdwg.mxu0
        %1067 = vmatprep.subr.mxu0 %v457
        %1068 = vmatpush1.msra.mxu0 %v456
        %1069 = vmatprep.subr.mxu0 %v459
        %1070 = vmatpush1.msra.mxu0 %v458
        %1071 = vmatprep.subr.mxu0 %v461
        %1072 = vmatpush1.msra.mxu0 %v460
        %1073 = vmatprep.subr.mxu0 %v463
        %1074 = vmatpush1.msra.mxu0 %v462
        %1075 = vmatprep.subr.mxu0 %v465
        %1076 = vmatpush1.msra.mxu0 %v464
        %1077 = vmatprep.subr.mxu0 %v467
        %1078 = vmatpush1.msra.mxu0 %v466
        %1079 = vmatprep.subr.mxu0 %v469
        %1080 = vmatpush1.msra.mxu0 %v468
        %1081 = vmatprep.subr.mxu0 %v471
        %1082 = vmatpush1.msra.mxu0 %v470
        %1083 = vmatprep.subr.mxu0 %v473
        %1084 = vmatpush1.msra.mxu0 %v472
        %1085 = vmatprep.subr.mxu0 %v475
        %1086 = vmatpush1.msra.mxu0 %v474
        %1087 = vmatprep.subr.mxu0 %v477
        %1088 = vmatpush1.msra.mxu0 %v476
        %1089 = vmatprep.subr.mxu0 %v479
        %1090 = vmatpush1.msra.mxu0 %v478
        %1091 = vmatprep.subr.mxu0 %v481
        %1092 = vmatpush1.msra.mxu0 %v480
        %1093 = vmatprep.subr.mxu0 %v483
        %1094 = vmatpush1.msra.mxu0 %v482
        %1095 = vmatprep.subr.mxu0 %v485
        %1096 = vmatpush1.msra.mxu0 %v484
        %1097 = vmatprep.subr.mxu0 %v487
        %1098 = vmatpush1.msra.mxu0 %v486
        %1099 = vmatprep.subr.mxu0 %v489
        %1100 = vmatpush1.msra.mxu0 %v488
        %1101 = vmatprep.subr.mxu0 %v491
        %1102 = vmatpush1.msra.mxu0 %v490
        %1103 = vmatprep.subr.mxu0 %v493
        %1104 = vmatpush1.msra.mxu0 %v492
        %1105 = vmatprep.subr.mxu0 %v495
        %1106 = vmatpush1.msra.mxu0 %v494
        %1107 = vmatprep.subr.mxu0 %v497
        %1108 = vmatpush1.msra.mxu0 %v496
        %1109 = vmatprep.subr.mxu0 %v499
        %1110 = vmatpush1.msra.mxu0 %v498
        %1111 = vmatprep.subr.mxu0 %v501
        %1112 = vmatpush1.msra.mxu0 %v500
        %1113 = vmatprep.subr.mxu0 %v503
        %1114 = vmatpush1.msra.mxu0 %v502
        %1115 = vmatprep.subr.mxu0 %v505
        %1116 = vmatpush1.msra.mxu0 %v504
        %1117 = vmatprep.subr.mxu0 %v507
        %1118 = vmatpush1.msra.mxu0 %v506
        %1119 = vmatprep.subr.mxu0 %v509
        %1120 = vmatpush1.msra.mxu0 %v508
        %1121 = vmatprep.subr.mxu0 %v511
        %1122 = vmatpush1.msra.mxu0 %v510
        %1123 = vmatprep.subr.mxu0 %v513
        %1124 = vmatpush1.msra.mxu0 %v512
        %1125 = vmatprep.subr.mxu0 %v515
        %1126 = vmatpush1.msra.mxu0 %v514
        %1127 = vmatprep.subr.mxu0 %v517
        %1128 = vmatpush1.msra.mxu0 %v516
        %1129 = vmatprep.subr.mxu0 %v519
        %1130 = vmatpush1.msra.mxu0 %v518
        %1131 = vmatprep.mubr.f32.mxu0 %v207
        %1132 = vmatmul.mubr.f32.gmra.mrb[0].mxu0 %v206
        %v1133 = vpop.f32.mrb[0].mxu0
        %v1134 = vadd.f32 %v1045, %v1133
        %v1135 = vpop.f32.mrb[0].mxu0
        %v1136 = vadd.f32 %v1047, %v1135
        %1137 = vmatprep.mubr.f32.mxu0 %v223
        %1138 = vmatmul.mubr.f32.gmra.mrb[0].mxu0 %v222
        %v1139 = vpop.f32.mrb[0].mxu0
        %v1140 = vadd.f32 %v1051, %v1139
        %v1141 = vpop.f32.mrb[0].mxu0
        %v1142 = vadd.f32 %v1053, %v1141
        %1143 = vmatprep.mubr.f32.mxu0 %v239
        %1144 = vmatmul.mubr.f32.gmra.mrb[0].mxu0 %v238
        %v1145 = vpop.f32.mrb[0].mxu0
        %v1146 = vadd.f32 %v1057, %v1145
        %v1147 = vpop.f32.mrb[0].mxu0
        %v1148 = vadd.f32 %v1059, %v1147
        %1149 = vmatprep.mubr.f32.mxu0 %v255
        %1150 = vmatmul.mubr.f32.gmra.mrb[0].mxu0 %v254
        %v1151 = vpop.f32.mrb[0].mxu0
        %v1152 = vadd.f32 %v1063, %v1151
        %v1153 = vpop.f32.mrb[0].mxu0
        %v1154 = vadd.f32 %v1065, %v1153
        %1155 = vdwg.mxu0
        %1156 = vmatprep.subr.mxu0 %v521
        %1157 = vmatpush1.msra.mxu0 %v520
        %1158 = vmatprep.subr.mxu0 %v523
        %1159 = vmatpush1.msra.mxu0 %v522
        %1160 = vmatprep.subr.mxu0 %v525
        %1161 = vmatpush1.msra.mxu0 %v524
        %1162 = vmatprep.subr.mxu0 %v527
        %1163 = vmatpush1.msra.mxu0 %v526
        %1164 = vmatprep.subr.mxu0 %v529
        %1165 = vmatpush1.msra.mxu0 %v528
        %1166 = vmatprep.subr.mxu0 %v531
        %1167 = vmatpush1.msra.mxu0 %v530
        %1168 = vmatprep.subr.mxu0 %v533
        %1169 = vmatpush1.msra.mxu0 %v532
        %1170 = vmatprep.subr.mxu0 %v535
        %1171 = vmatpush1.msra.mxu0 %v534
        %1172 = vmatprep.subr.mxu0 %v537
        %1173 = vmatpush1.msra.mxu0 %v536
        %1174 = vmatprep.subr.mxu0 %v539
        %1175 = vmatpush1.msra.mxu0 %v538
        %1176 = vmatprep.subr.mxu0 %v541
        %1177 = vmatpush1.msra.mxu0 %v540
        %1178 = vmatprep.subr.mxu0 %v543
        %1179 = vmatpush1.msra.mxu0 %v542
        %1180 = vmatprep.subr.mxu0 %v545
        %1181 = vmatpush1.msra.mxu0 %v544
        %1182 = vmatprep.subr.mxu0 %v547
        %1183 = vmatpush1.msra.mxu0 %v546
        %1184 = vmatprep.subr.mxu0 %v549
        %1185 = vmatpush1.msra.mxu0 %v548
        %1186 = vmatprep.subr.mxu0 %v551
        %1187 = vmatpush1.msra.mxu0 %v550
        %1188 = vmatprep.subr.mxu0 %v553
        %1189 = vmatpush1.msra.mxu0 %v552
        %1190 = vmatprep.subr.mxu0 %v555
        %1191 = vmatpush1.msra.mxu0 %v554
        %1192 = vmatprep.subr.mxu0 %v557
        %1193 = vmatpush1.msra.mxu0 %v556
        %1194 = vmatprep.subr.mxu0 %v559
        %1195 = vmatpush1.msra.mxu0 %v558
        %1196 = vmatprep.subr.mxu0 %v561
        %1197 = vmatpush1.msra.mxu0 %v560
        %1198 = vmatprep.subr.mxu0 %v563
        %1199 = vmatpush1.msra.mxu0 %v562
        %1200 = vmatprep.subr.mxu0 %v565
        %1201 = vmatpush1.msra.mxu0 %v564
        %1202 = vmatprep.subr.mxu0 %v567
        %1203 = vmatpush1.msra.mxu0 %v566
        %1204 = vmatprep.subr.mxu0 %v569
        %1205 = vmatpush1.msra.mxu0 %v568
        %1206 = vmatprep.subr.mxu0 %v571
        %1207 = vmatpush1.msra.mxu0 %v570
        %1208 = vmatprep.subr.mxu0 %v573
        %1209 = vmatpush1.msra.mxu0 %v572
        %1210 = vmatprep.subr.mxu0 %v575
        %1211 = vmatpush1.msra.mxu0 %v574
        %1212 = vmatprep.subr.mxu0 %v577
        %1213 = vmatpush1.msra.mxu0 %v576
        %1214 = vmatprep.subr.mxu0 %v579
        %1215 = vmatpush1.msra.mxu0 %v578
        %1216 = vmatprep.subr.mxu0 %v581
        %1217 = vmatpush1.msra.mxu0 %v580
        %1218 = vmatprep.subr.mxu0 %v583
        %1219 = vmatpush1.msra.mxu0 %v582
        %1220 = vmatprep.mubr.f32.mxu0 %v209
        %1221 = vmatmul.mubr.f32.gmra.mrb[0].mxu0 %v208
        %v1222 = vpop.f32.mrb[0].mxu0
        %v1223 = vadd.f32 %v1134, %v1222
        %v1224 = vpop.f32.mrb[0].mxu0
        %v1225 = vadd.f32 %v1136, %v1224
        %1226 = vmatprep.mubr.f32.mxu0 %v225
        %1227 = vmatmul.mubr.f32.gmra.mrb[0].mxu0 %v224
        %v1228 = vpop.f32.mrb[0].mxu0
        %v1229 = vadd.f32 %v1140, %v1228
        %v1230 = vpop.f32.mrb[0].mxu0
        %v1231 = vadd.f32 %v1142, %v1230
        %1232 = vmatprep.mubr.f32.mxu0 %v241
        %1233 = vmatmul.mubr.f32.gmra.mrb[0].mxu0 %v240
        %v1234 = vpop.f32.mrb[0].mxu0
        %v1235 = vadd.f32 %v1146, %v1234
        %v1236 = vpop.f32.mrb[0].mxu0
        %v1237 = vadd.f32 %v1148, %v1236
        %1238 = vmatprep.mubr.f32.mxu0 %v257
        %1239 = vmatmul.mubr.f32.gmra.mrb[0].mxu0 %v256
        %v1240 = vpop.f32.mrb[0].mxu0
        %v1241 = vadd.f32 %v1152, %v1240
        %v1242 = vpop.f32.mrb[0].mxu0
        %v1243 = vadd.f32 %v1154, %v1242
        %1244 = vdwg.mxu0
        %1245 = vmatprep.subr.mxu0 %v585
        %1246 = vmatpush1.msra.mxu0 %v584
        %1247 = vmatprep.subr.mxu0 %v587
        %1248 = vmatpush1.msra.mxu0 %v586
        %1249 = vmatprep.subr.mxu0 %v589
        %1250 = vmatpush1.msra.mxu0 %v588
        %1251 = vmatprep.subr.mxu0 %v591
        %1252 = vmatpush1.msra.mxu0 %v590
        %1253 = vmatprep.subr.mxu0 %v593
        %1254 = vmatpush1.msra.mxu0 %v592
        %1255 = vmatprep.subr.mxu0 %v595
        %1256 = vmatpush1.msra.mxu0 %v594
        %1257 = vmatprep.subr.mxu0 %v597
        %1258 = vmatpush1.msra.mxu0 %v596
        %1259 = vmatprep.subr.mxu0 %v599
        %1260 = vmatpush1.msra.mxu0 %v598
        %1261 = vmatprep.subr.mxu0 %v601
        %1262 = vmatpush1.msra.mxu0 %v600
        %1263 = vmatprep.subr.mxu0 %v603
        %1264 = vmatpush1.msra.mxu0 %v602
        %1265 = vmatprep.subr.mxu0 %v605
        %1266 = vmatpush1.msra.mxu0 %v604
        %1267 = vmatprep.subr.mxu0 %v607
        %1268 = vmatpush1.msra.mxu0 %v606
        %1269 = vmatprep.subr.mxu0 %v609
        %1270 = vmatpush1.msra.mxu0 %v608
        %1271 = vmatprep.subr.mxu0 %v611
        %1272 = vmatpush1.msra.mxu0 %v610
        %1273 = vmatprep.subr.mxu0 %v613
        %1274 = vmatpush1.msra.mxu0 %v612
        %1275 = vmatprep.subr.mxu0 %v615
        %1276 = vmatpush1.msra.mxu0 %v614
        %1277 = vmatprep.subr.mxu0 %v617
        %1278 = vmatpush1.msra.mxu0 %v616
        %1279 = vmatprep.subr.mxu0 %v619
        %1280 = vmatpush1.msra.mxu0 %v618
        %1281 = vmatprep.subr.mxu0 %v621
        %1282 = vmatpush1.msra.mxu0 %v620
        %1283 = vmatprep.subr.mxu0 %v623
        %1284 = vmatpush1.msra.mxu0 %v622
        %1285 = vmatprep.subr.mxu0 %v625
        %1286 = vmatpush1.msra.mxu0 %v624
        %1287 = vmatprep.subr.mxu0 %v627
        %1288 = vmatpush1.msra.mxu0 %v626
        %1289 = vmatprep.subr.mxu0 %v629
        %1290 = vmatpush1.msra.mxu0 %v628
        %1291 = vmatprep.subr.mxu0 %v631
        %1292 = vmatpush1.msra.mxu0 %v630
        %1293 = vmatprep.subr.mxu0 %v633
        %1294 = vmatpush1.msra.mxu0 %v632
        %1295 = vmatprep.subr.mxu0 %v635
        %1296 = vmatpush1.msra.mxu0 %v634
        %1297 = vmatprep.subr.mxu0 %v637
        %1298 = vmatpush1.msra.mxu0 %v636
        %1299 = vmatprep.subr.mxu0 %v639
        %1300 = vmatpush1.msra.mxu0 %v638
        %1301 = vmatprep.subr.mxu0 %v641
        %1302 = vmatpush1.msra.mxu0 %v640
        %1303 = vmatprep.subr.mxu0 %v643
        %1304 = vmatpush1.msra.mxu0 %v642
        %1305 = vmatprep.subr.mxu0 %v645
        %1306 = vmatpush1.msra.mxu0 %v644
        %1307 = vmatprep.subr.mxu0 %v647
        %1308 = vmatpush1.msra.mxu0 %v646
        %1309 = vmatprep.mubr.f32.mxu0 %v211
        %1310 = vmatmul.mubr.f32.gmra.mrb[0].mxu0 %v210
        %v1311 = vpop.f32.mrb[0].mxu0
        %v1312 = vadd.f32 %v1223, %v1311
        %v1313 = vpop.f32.mrb[0].mxu0
        %v1314 = vadd.f32 %v1225, %v1313
        %1315 = vmatprep.mubr.f32.mxu0 %v227
        %1316 = vmatmul.mubr.f32.gmra.mrb[0].mxu0 %v226
        %v1317 = vpop.f32.mrb[0].mxu0
        %v1318 = vadd.f32 %v1229, %v1317
        %v1319 = vpop.f32.mrb[0].mxu0
        %v1320 = vadd.f32 %v1231, %v1319
        %1321 = vmatprep.mubr.f32.mxu0 %v243
        %1322 = vmatmul.mubr.f32.gmra.mrb[0].mxu0 %v242
        %v1323 = vpop.f32.mrb[0].mxu0
        %v1324 = vadd.f32 %v1235, %v1323
        %v1325 = vpop.f32.mrb[0].mxu0
        %v1326 = vadd.f32 %v1237, %v1325
        %1327 = vmatprep.mubr.f32.mxu0 %v259
        %1328 = vmatmul.mubr.f32.gmra.mrb[0].mxu0 %v258
        %v1329 = vpop.f32.mrb[0].mxu0
        %v1330 = vadd.f32 %v1241, %v1329
        %v1331 = vpop.f32.mrb[0].mxu0
        %v1332 = vadd.f32 %v1243, %v1331
        %1333 = vdwg.mxu0
        %1334 = vmatprep.subr.mxu0 %v649
        %1335 = vmatpush1.msra.mxu0 %v648
        %1336 = vmatprep.subr.mxu0 %v651
        %1337 = vmatpush1.msra.mxu0 %v650
        %1338 = vmatprep.subr.mxu0 %v653
        %1339 = vmatpush1.msra.mxu0 %v652
        %1340 = vmatprep.subr.mxu0 %v655
        %1341 = vmatpush1.msra.mxu0 %v654
        %1342 = vmatprep.subr.mxu0 %v657
        %1343 = vmatpush1.msra.mxu0 %v656
        %1344 = vmatprep.subr.mxu0 %v659
        %1345 = vmatpush1.msra.mxu0 %v658
        %1346 = vmatprep.subr.mxu0 %v661
        %1347 = vmatpush1.msra.mxu0 %v660
        %1348 = vmatprep.subr.mxu0 %v663
        %1349 = vmatpush1.msra.mxu0 %v662
        %1350 = vmatprep.subr.mxu0 %v665
        %1351 = vmatpush1.msra.mxu0 %v664
        %1352 = vmatprep.subr.mxu0 %v667
        %1353 = vmatpush1.msra.mxu0 %v666
        %1354 = vmatprep.subr.mxu0 %v669
        %1355 = vmatpush1.msra.mxu0 %v668
        %1356 = vmatprep.subr.mxu0 %v671
        %1357 = vmatpush1.msra.mxu0 %v670
        %1358 = vmatprep.subr.mxu0 %v673
        %1359 = vmatpush1.msra.mxu0 %v672
        %1360 = vmatprep.subr.mxu0 %v675
        %1361 = vmatpush1.msra.mxu0 %v674
        %1362 = vmatprep.subr.mxu0 %v677
        %1363 = vmatpush1.msra.mxu0 %v676
        %1364 = vmatprep.subr.mxu0 %v679
        %1365 = vmatpush1.msra.mxu0 %v678
        %1366 = vmatprep.subr.mxu0 %v681
        %1367 = vmatpush1.msra.mxu0 %v680
        %1368 = vmatprep.subr.mxu0 %v683
        %1369 = vmatpush1.msra.mxu0 %v682
        %1370 = vmatprep.subr.mxu0 %v685
        %1371 = vmatpush1.msra.mxu0 %v684
        %1372 = vmatprep.subr.mxu0 %v687
        %1373 = vmatpush1.msra.mxu0 %v686
        %1374 = vmatprep.subr.mxu0 %v689
        %1375 = vmatpush1.msra.mxu0 %v688
        %1376 = vmatprep.subr.mxu0 %v691
        %1377 = vmatpush1.msra.mxu0 %v690
        %1378 = vmatprep.subr.mxu0 %v693
        %1379 = vmatpush1.msra.mxu0 %v692
        %1380 = vmatprep.subr.mxu0 %v695
        %1381 = vmatpush1.msra.mxu0 %v694
        %1382 = vmatprep.subr.mxu0 %v697
        %1383 = vmatpush1.msra.mxu0 %v696
        %1384 = vmatprep.subr.mxu0 %v699
        %1385 = vmatpush1.msra.mxu0 %v698
        %1386 = vmatprep.subr.mxu0 %v701
        %1387 = vmatpush1.msra.mxu0 %v700
        %1388 = vmatprep.subr.mxu0 %v703
        %1389 = vmatpush1.msra.mxu0 %v702
        %1390 = vmatprep.subr.mxu0 %v705
        %1391 = vmatpush1.msra.mxu0 %v704
        %1392 = vmatprep.subr.mxu0 %v707
        %1393 = vmatpush1.msra.mxu0 %v706
        %1394 = vmatprep.subr.mxu0 %v709
        %1395 = vmatpush1.msra.mxu0 %v708
        %1396 = vmatprep.subr.mxu0 %v711
        %1397 = vmatpush1.msra.mxu0 %v710
        %1398 = vmatprep.mubr.f32.mxu0 %v213
        %1399 = vmatmul.mubr.f32.gmra.mrb[0].mxu0 %v212
        %v1400 = vpop.f32.mrb[0].mxu0
        %v1401 = vadd.f32 %v1312, %v1400
        %v1402 = vpop.f32.mrb[0].mxu0
        %v1403 = vadd.f32 %v1314, %v1402
        %1404 = vmatprep.mubr.f32.mxu0 %v229
        %1405 = vmatmul.mubr.f32.gmra.mrb[0].mxu0 %v228
        %v1406 = vpop.f32.mrb[0].mxu0
        %v1407 = vadd.f32 %v1318, %v1406
        %v1408 = vpop.f32.mrb[0].mxu0
        %v1409 = vadd.f32 %v1320, %v1408
        %1410 = vmatprep.mubr.f32.mxu0 %v245
        %1411 = vmatmul.mubr.f32.gmra.mrb[0].mxu0 %v244
        %v1412 = vpop.f32.mrb[0].mxu0
        %v1413 = vadd.f32 %v1324, %v1412
        %v1414 = vpop.f32.mrb[0].mxu0
        %v1415 = vadd.f32 %v1326, %v1414
        %1416 = vmatprep.mubr.f32.mxu0 %v261
        %1417 = vmatmul.mubr.f32.gmra.mrb[0].mxu0 %v260
        %v1418 = vpop.f32.mrb[0].mxu0
        %v1419 = vadd.f32 %v1330, %v1418
        %v1420 = vpop.f32.mrb[0].mxu0
        %v1421 = vadd.f32 %v1332, %v1420
        %1422 = vdwg.mxu0
        %1423 = vmatprep.subr.mxu0 %v713
        %1424 = vmatpush1.msra.mxu0 %v712
        %1425 = vmatprep.subr.mxu0 %v715
        %1426 = vmatpush1.msra.mxu0 %v714
        %1427 = vmatprep.subr.mxu0 %v717
        %1428 = vmatpush1.msra.mxu0 %v716
        %1429 = vmatprep.subr.mxu0 %v719
        %1430 = vmatpush1.msra.mxu0 %v718
        %1431 = vmatprep.subr.mxu0 %v721
        %1432 = vmatpush1.msra.mxu0 %v720
        %1433 = vmatprep.subr.mxu0 %v723
        %1434 = vmatpush1.msra.mxu0 %v722
        %1435 = vmatprep.subr.mxu0 %v725
        %1436 = vmatpush1.msra.mxu0 %v724
        %1437 = vmatprep.subr.mxu0 %v727
        %1438 = vmatpush1.msra.mxu0 %v726
        %1439 = vmatprep.subr.mxu0 %v729
        %1440 = vmatpush1.msra.mxu0 %v728
        %1441 = vmatprep.subr.mxu0 %v731
        %1442 = vmatpush1.msra.mxu0 %v730
        %1443 = vmatprep.subr.mxu0 %v733
        %1444 = vmatpush1.msra.mxu0 %v732
        %1445 = vmatprep.subr.mxu0 %v735
        %1446 = vmatpush1.msra.mxu0 %v734
        %1447 = vmatprep.subr.mxu0 %v737
        %1448 = vmatpush1.msra.mxu0 %v736
        %1449 = vmatprep.subr.mxu0 %v739
        %1450 = vmatpush1.msra.mxu0 %v738
        %1451 = vmatprep.subr.mxu0 %v741
        %1452 = vmatpush1.msra.mxu0 %v740
        %1453 = vmatprep.subr.mxu0 %v743
        %1454 = vmatpush1.msra.mxu0 %v742
        %1455 = vmatprep.subr.mxu0 %v745
        %1456 = vmatpush1.msra.mxu0 %v744
        %1457 = vmatprep.subr.mxu0 %v747
        %1458 = vmatpush1.msra.mxu0 %v746
        %1459 = vmatprep.subr.mxu0 %v749
        %1460 = vmatpush1.msra.mxu0 %v748
        %1461 = vmatprep.subr.mxu0 %v751
        %1462 = vmatpush1.msra.mxu0 %v750
        %1463 = vmatprep.subr.mxu0 %v753
        %1464 = vmatpush1.msra.mxu0 %v752
        %1465 = vmatprep.subr.mxu0 %v755
        %1466 = vmatpush1.msra.mxu0 %v754
        %1467 = vmatprep.subr.mxu0 %v757
        %1468 = vmatpush1.msra.mxu0 %v756
        %1469 = vmatprep.subr.mxu0 %v759
        %1470 = vmatpush1.msra.mxu0 %v758
        %1471 = vmatprep.subr.mxu0 %v761
        %1472 = vmatpush1.msra.mxu0 %v760
        %1473 = vmatprep.subr.mxu0 %v763
        %1474 = vmatpush1.msra.mxu0 %v762
        %1475 = vmatprep.subr.mxu0 %v765
        %1476 = vmatpush1.msra.mxu0 %v764
        %1477 = vmatprep.subr.mxu0 %v767
        %1478 = vmatpush1.msra.mxu0 %v766
        %1479 = vmatprep.subr.mxu0 %v769
        %1480 = vmatpush1.msra.mxu0 %v768
        %1481 = vmatprep.subr.mxu0 %v771
        %1482 = vmatpush1.msra.mxu0 %v770
        %1483 = vmatprep.subr.mxu0 %v773
        %1484 = vmatpush1.msra.mxu0 %v772
        %1485 = vmatprep.subr.mxu0 %v775
        %1486 = vmatpush1.msra.mxu0 %v774
        %1487 = vmatprep.mubr.f32.mxu0 %v215
        %1488 = vmatmul.mubr.f32.gmra.mrb[0].mxu0 %v214
        %v1489 = vpop.f32.mrb[0].mxu0
        %v1490 = vadd.f32 %v1401, %v1489
        %v1491 = vpop.f32.mrb[0].mxu0
        %v1492 = vadd.f32 %v1403, %v1491
        %1493 = vmatprep.mubr.f32.mxu0 %v231
        %1494 = vmatmul.mubr.f32.gmra.mrb[0].mxu0 %v230
        %v1495 = vpop.f32.mrb[0].mxu0
        %v1496 = vadd.f32 %v1407, %v1495
        %v1497 = vpop.f32.mrb[0].mxu0
        %v1498 = vadd.f32 %v1409, %v1497
        %1499 = vmatprep.mubr.f32.mxu0 %v247
        %1500 = vmatmul.mubr.f32.gmra.mrb[0].mxu0 %v246
        %v1501 = vpop.f32.mrb[0].mxu0
        %v1502 = vadd.f32 %v1413, %v1501
        %v1503 = vpop.f32.mrb[0].mxu0
        %v1504 = vadd.f32 %v1415, %v1503
        %1505 = vmatprep.mubr.f32.mxu0 %v263
        %1506 = vmatmul.mubr.f32.gmra.mrb[0].mxu0 %v262
        %v1507 = vpop.f32.mrb[0].mxu0
        %v1508 = vadd.f32 %v1419, %v1507
        %v1509 = vpop.f32.mrb[0].mxu0
        %v1510 = vadd.f32 %v1421, %v1509
        %1511 = vdwg.mxu0
        %v1512 = vmul.f32 %v1490, %v1490
        %v1513 = vmul.f32 %v1492, %v1492
        %v1514 = vmul.f32 %v1496, %v1496
        %v1515 = vmul.f32 %v1498, %v1498
        %v1516 = vmul.f32 %v1502, %v1502
        %v1517 = vmul.f32 %v1504, %v1504
        %v1518 = vmul.f32 %v1508, %v1508
        %v1519 = vmul.f32 %v1510, %v1510
        %v1520 = vadd.f32 %v1512, %v1514
        %v1521 = vadd.f32 %v1520, %v1516
        %v1522 = vadd.f32 %v1521, %v1518
        %v1523 = vrot.slane %v1522, 4
        %v1524 = vadd.f32 %v1522, %v1523
        %v1525 = vrot.slane %v1524, 2
        %v1526 = vadd.f32 %v1524, %v1525
        %v1527 = vrot.slane %v1526, 1
        %v1528 = vadd.f32 %v1526, %v1527
        %v1529 = vadd.f32 %v1513, %v1515
        %v1530 = vadd.f32 %v1529, %v1517
        %v1531 = vadd.f32 %v1530, %v1519
        %v1532 = vrot.slane %v1531, 4
        %v1533 = vadd.f32 %v1531, %v1532
        %v1534 = vrot.slane %v1533, 2
        %v1535 = vadd.f32 %v1533, %v1534
        %v1536 = vrot.slane %v1535, 1
        %v1537 = vadd.f32 %v1535, %v1536
        %v1538 = vmax.f32 %v1528, 1e-24
        %v1539 = vmax.f32 %v1537, 1e-24
        %v1540 = vrsqrt.pop %v1538
        %v1541 = vrsqrt.pop %v1539
        %v1542 = vmul.f32 %v1490, %v1540
        %v1543 = vmul.f32 %v1492, %v1541
        %v1544 = vmul.f32 %v1496, %v1540
        %v1545 = vmul.f32 %v1498, %v1541
        %v1546 = vmul.f32 %v1502, %v1540
        %v1547 = vmul.f32 %v1504, %v1541
        %v1548 = vmul.f32 %v1508, %v1540
        %v1549 = vmul.f32 %v1510, %v1541
        %1550 = vst [vmem:[%s188] sm:$0xff] %v1542
        %1551 = vst [vmem:[%s188 + $0x8] sm:$0xff] %v1543
        %1552 = vst [vmem:[%s188 + $0x10] sm:$0xff] %v1544
        %1553 = vst [vmem:[%s188 + $0x18] sm:$0xff] %v1545
        %1554 = vst [vmem:[%s188 + $0x20] sm:$0xff] %v1546
        %1555 = vst [vmem:[%s188 + $0x28] sm:$0xff] %v1547
        %1556 = vst [vmem:[%s188 + $0x30] sm:$0xff] %v1548
        %1557 = vst [vmem:[%s188 + $0x38] sm:$0xff] %v1549
        %s1558 = sand.u32 %s109, 1
        %s1559 = scalar_lea.sflag [#allocation3], %s1558
        %s1560 = sand.u32 %s109, 1
        %s1561 = smul.addr %s1560, 64
        %s1562 = scalar_lea.vmem [#allocation2], %s1561
        // Predicated region
        $region33: #{image_model_forward.1} parent=31 // pred_check
          %p1563 = pneg %p119
        $region34: #{image_model_forward.1} parent=31 // pred_check_branch
          %1565 = sbr.rel (%p1563) target = $region36
        $region35: #{image_model_forward.1} parent=31 // pred_region
          %s1566 = smul.u32 2, %s22
          %s1568 = ssub.s32 1024, 1024
          %1569 = vsyncadd %s1559, %s1568
          %s1570 = smul.addr %s21, 8
          %s1571 = sadd.s32 %s1566, %s1570
          %s1572 = smul.addr %s1571, 128
          %s1573 = scalar_lea.hbm %s3, %s1572
          %s1574 = sshll.u32 %s1562, 4
          %s1575 = int_to_ptr.vmem [resolvable:$true] %s1574
          %1580 = dma.vmem_to_hbm [thread:$0]  %s1575, 1024, %s1573, %s1559, 256, 256, 16
        $region36: #{image_model_forward.1} parent=31 // pred_fallthru
          _
      $region32: #{image_model_forward.1} parent=5 // pred_fallthru
        _
      %p1581 = scmp.le.s32.totalorder 2, %s12
      // Predicated region
      $region37: #{image_model_forward.1} parent=5 // pred_check
        %p1582 = pneg %p1581
      $region38: #{image_model_forward.1} parent=5 // pred_check_branch
        %1584 = sbr.rel (%p1582) target = $region40
      $region39: #{image_model_forward.1} parent=5 // pred_region
        %s1585 = ssub.s32 %s12, 2
        // Predicated region
        $region41: #{image_model_forward.1} parent=39 // pred_check
          %p1586 = pneg %p125
        $region42: #{image_model_forward.1} parent=39 // pred_check_branch
          %1588 = sbr.rel (%p1586) target = $region44
        $region43: #{image_model_forward.1} parent=39 // pred_region
          %s1589 = sand.u32 %s110, 1
          %s1590 = scalar_lea.sflag [#allocation3], %s1589
          %s1591 = sand.u32 %s110, 1
          %s1592 = smul.addr %s1591, 64
          %s1593 = scalar_lea.vmem [#allocation2], %s1592
          %1594 = dma.done %s1590, 1024
        $region44: #{image_model_forward.1} parent=39 // pred_fallthru
          _
      $region40: #{image_model_forward.1} parent=5 // pred_fallthru
        _
    $region6: #{image_model_forward.1} parent=1 // loop_footer
      %s16 = sadd.s32 1, %s12
    $region7: #{image_model_forward.1} parent=1 // loop_footer_branch
      %11 = sbr.rel target = $region3
    $region8: #{image_model_forward.1} parent=1 // loop_exit
      _
    %1595 = vsyncpa [#allocation3], 1
    %s1596 = scalar_lea.sflag [#allocation3], 1
    %1597 = vsyncpa %s1596, 1

</llo_original>
